<compile_context>
chip_gen: v7x
topology: tpu7x:2x2x1
jax: 0.10.0
libtpu: 0.0.40
codegen_flags: <defaults>
</compile_context>

<pallas_src>
import jax
import jax.numpy as jnp
from jax.experimental import pallas as pl
from jax.experimental.pallas import tpu as pltpu

IN_DIM = 5     # fc0 input features
FC_DIM = 32    # fc0 output / LSTM input size
HID = 64       # LSTM hidden size
BP = 8         # batch padded to one sublane tile
GP = 128       # per-gate lane pad (one lane tile per gate)


def rnn_model_kernel(x_ref, wx_ref, bx_ref, whh_ref, wout_ref, bout_ref, out_ref):
    """x_ref: (T*8, IN_DIM) time-major, batch zero-padded to 8; out_ref: (8, 1)."""
    T = x_ref.shape[0] // BP

    # One fat matmul for every timestep's input-side gate pre-activation.
    # fc0 and all biases are already folded in.  (T*8, 5) @ (5, 512) -> (T*8, 512)
    xproj = jnp.dot(x_ref[...], wx_ref[...],
                    preferred_element_type=jnp.float32) + bx_ref[...]

    whh = whh_ref[...]                              # (128, 512), loop-invariant
    h = jnp.zeros((BP, GP), jnp.float32)            # real hidden state in lanes [0:64]
    c = jnp.zeros((BP, GP), jnp.float32)

    # Sequential LSTM recurrence; T is small and static -> unroll at trace time.
    # Each xproj slice starts at a multiple of 8 rows -> sublane-tile aligned.
    for t in range(T):
        gates = xproj[t * BP:(t + 1) * BP, :] + jnp.dot(
            h, whh, preferred_element_type=jnp.float32)        # (8, 512)
        # Gate lane layout (set up at fold time): [i | f | o | g], 128 lanes each.
        sg = jax.nn.sigmoid(gates[:, :3 * GP])                  # i, f, o in one EUP pass
        g = jnp.tanh(gates[:, 3 * GP:])
        i = sg[:, 0 * GP:1 * GP]
        f = sg[:, 1 * GP:2 * GP]
        o = sg[:, 2 * GP:3 * GP]
        c = f * c + i * g
        h = o * jnp.tanh(c)

    # out = h_T @ W_out^T + b_out, done as VPU multiply + cross-lane reduce
    # (wout padded lanes are zero, so padded h lanes never contribute).
    out_ref[...] = (jnp.sum(h * wout_ref[...], axis=-1, keepdims=True)
                    + bout_ref[...])                            # (8, 1)


def init_params(key):
    """Deterministic params matching the PyTorch module's shapes / default init bounds."""
    ks = jax.random.split(key, 8)
    b_fc = 1.0 / float(IN_DIM) ** 0.5
    W0 = jax.random.uniform(ks[0], (FC_DIM, IN_DIM), jnp.float32, -b_fc, b_fc)
    b0 = jax.random.uniform(ks[1], (FC_DIM,), jnp.float32, -b_fc, b_fc)
    b_l = 1.0 / float(HID) ** 0.5
    Wih = jax.random.uniform(ks[2], (4 * HID, FC_DIM), jnp.float32, -b_l, b_l)
    Whh = jax.random.uniform(ks[3], (4 * HID, HID), jnp.float32, -b_l, b_l)
    bih = jax.random.uniform(ks[4], (4 * HID,), jnp.float32, -b_l, b_l)
    bhh = jax.random.uniform(ks[5], (4 * HID,), jnp.float32, -b_l, b_l)
    Wout = jax.random.uniform(ks[6], (1, HID), jnp.float32, -b_l, b_l)
    bout = jax.random.uniform(ks[7], (1,), jnp.float32, -b_l, b_l)
    return (W0, b0, Wih, Whh, bih, bhh, Wout, bout)


def prepare_kernel_params(params):
    """One-time fold / reorder / pad / transpose of the PyTorch params (exact algebra)."""
    W0, b0, Wih, Whh, bih, bhh, Wout, bout = params
    H = HID

    # Fold fc0 into the LSTM input projection.
    Wx = Wih @ W0                                   # (4H, 5)
    bx = Wih @ b0 + bih + bhh                       # (4H,)

    # PyTorch gate row order is (i, f, g, o); kernel uses (i, f, o, g) so the three
    # sigmoid gates are contiguous.  Each gate is padded to its own 128-lane tile.
    perm = (0, 1, 3, 2)                             # dst k takes PyTorch gate perm[k]

    def pack_cols(W_rows):                          # (4H, K) -> (K, 4*GP)
        K = W_rows.shape[1]
        out = jnp.zeros((K, 4 * GP), jnp.float32)
        for dst, src in enumerate(perm):
            blk = W_rows[src * H:(src + 1) * H, :].astype(jnp.float32).T   # (K, H)
            out = out.at[:, dst * GP:dst * GP + H].set(blk)
        return out

    Wx_p = pack_cols(Wx)                            # (5, 512)
    bx_p = jnp.zeros((1, 4 * GP), jnp.float32)
    for dst, src in enumerate(perm):
        bx_p = bx_p.at[0, dst * GP:dst * GP + H].set(
            bx[src * H:(src + 1) * H].astype(jnp.float32))

    Whh_p = jnp.zeros((GP, 4 * GP), jnp.float32).at[:H, :].set(pack_cols(Whh))  # (128, 512)
    Wout_p = jnp.zeros((1, GP), jnp.float32).at[0, :H].set(Wout[0, :].astype(jnp.float32))
    bout_p = bout.reshape(1, 1).astype(jnp.float32)
    return (Wx_p, bx_p, Whh_p, Wout_p, bout_p)


@jax.jit
def rnn_model_forward(x, kernel_params):
    """x: (B, T, 5) — exactly what the PyTorch module receives (batch_first)."""
    Wx_p, bx_p, Whh_p, Wout_p, bout_p = kernel_params
    B, T, _ = x.shape

    # Pad batch to one sublane tile, go time-major, flatten -> (T*8, 5).
    x_pad = jnp.zeros((BP, T, IN_DIM), jnp.float32).at[:B].set(x.astype(jnp.float32))
    x_tm = jnp.transpose(x_pad, (1, 0, 2)).reshape(T * BP, IN_DIM)

    vmem = pl.BlockSpec(memory_space=pltpu.MemorySpace.VMEM)
    out_pad = pl.pallas_call(
        rnn_model_kernel,
        out_shape=jax.ShapeDtypeStruct((BP, 1), jnp.float32),
        in_specs=[vmem] * 6,
        out_specs=vmem,
    )(x_tm, Wx_p, bx_p, Whh_p, Wout_p, bout_p)
    return out_pad[:B]


def reference_forward(x, params):
    """Pure-JAX (XLA) reference mirroring the PyTorch forward exactly."""
    W0, b0, Wih, Whh, bih, bhh, Wout, bout = params
    B, T, _ = x.shape
    xf = x.astype(jnp.float32) @ W0.T + b0                     # fc0: (B, T, 32)
    h = jnp.zeros((B, HID), jnp.float32)
    c = jnp.zeros((B, HID), jnp.float32)
    for t in range(T):
        gates = xf[:, t, :] @ Wih.T + bih + h @ Whh.T + bhh    # (B, 4H)
        i = jax.nn.sigmoid(gates[:, 0 * HID:1 * HID])
        f = jax.nn.sigmoid(gates[:, 1 * HID:2 * HID])
        g = jnp.tanh(gates[:, 2 * HID:3 * HID])
        o = jax.nn.sigmoid(gates[:, 3 * HID:4 * HID])
        c = f * c + i * g
        h = o * jnp.tanh(c)
    return h @ Wout.T + bout                                   # (B, 1)


if __name__ == "__main__":
    key = jax.random.PRNGKey(0)
    key, kx = jax.random.split(key)

    B, T = 2, 8
    x = jax.random.normal(kx, (B, T, IN_DIM), jnp.float32)

    params = init_params(key)
    kparams = prepare_kernel_params(params)        # one-time, off the per-call path

    out = jax.block_until_ready(rnn_model_forward(x, kparams))
    ref = jax.block_until_ready(reference_forward(x, params))

    assert out.shape == (B, 1), out.shape
    assert jnp.allclose(out, ref, atol=1e-4, rtol=1e-4), (out, ref)

    print("KERNEL_OK")
</pallas_src>

<mosaic_0001>
module attributes {stable_mosaic.version = 11 : i64} {
  func.func @rnn_model_kernel(%arg0: memref<64x5xf32, #tpu.memory_space<vmem>>, %arg1: memref<5x512xf32, #tpu.memory_space<vmem>>, %arg2: memref<1x512xf32, #tpu.memory_space<vmem>>, %arg3: memref<128x512xf32, #tpu.memory_space<vmem>>, %arg4: memref<1x128xf32, #tpu.memory_space<vmem>>, %arg5: memref<1x1xf32, #tpu.memory_space<vmem>>, %arg6: memref<8x1xf32, #tpu.memory_space<vmem>>) attributes {dimension_semantics = [], scalar_prefetch = 0 : i64, scratch_operands = 0 : i64, tpu.core_type = #tpu.core_type<tc>} {
    %c0 = arith.constant 0 : index
    %c0_0 = arith.constant 0 : index
    %0 = vector.load %arg0[%c0, %c0_0] : memref<64x5xf32, #tpu.memory_space<vmem>>, vector<64x5xf32>
    %c0_1 = arith.constant 0 : index
    %c0_2 = arith.constant 0 : index
    %1 = vector.load %arg1[%c0_1, %c0_2] : memref<5x512xf32, #tpu.memory_space<vmem>>, vector<5x512xf32>
    %cst = arith.constant dense<0.000000e+00> : vector<64x512xf32>
    %2 = tpu.matmul %0, %1, %cst {dimension_numbers = #tpu.dot_dimension_numbers<[1], [0], [0], [1], [0, 0, 1, 1], [], []>} : vector<64x5xf32>, vector<5x512xf32>, vector<64x512xf32> -> vector<64x512xf32>
    %c0_3 = arith.constant 0 : index
    %c0_4 = arith.constant 0 : index
    %3 = vector.load %arg2[%c0_3, %c0_4] : memref<1x512xf32, #tpu.memory_space<vmem>>, vector<1x512xf32>
    %4 = vector.broadcast %3 : vector<1x512xf32> to vector<64x512xf32>
    %5 = arith.addf %2, %4 : vector<64x512xf32>
    %c0_5 = arith.constant 0 : index
    %c0_6 = arith.constant 0 : index
    %6 = vector.load %arg3[%c0_5, %c0_6] : memref<128x512xf32, #tpu.memory_space<vmem>>, vector<128x512xf32>
    %cst_7 = arith.constant 0.000000e+00 : f32
    %7 = vector.broadcast %cst_7 : f32 to vector<8x128xf32>
    %cst_8 = arith.constant 0.000000e+00 : f32
    %8 = vector.broadcast %cst_8 : f32 to vector<8x128xf32>
    %9 = vector.extract_strided_slice %5 {offsets = [0, 0], sizes = [8, 512], strides = [1, 1]} : vector<64x512xf32> to vector<8x512xf32>
    %cst_9 = arith.constant dense<0.000000e+00> : vector<8x512xf32>
    %10 = tpu.matmul %7, %6, %cst_9 {dimension_numbers = #tpu.dot_dimension_numbers<[1], [0], [0], [1], [0, 0, 1, 1], [], []>} : vector<8x128xf32>, vector<128x512xf32>, vector<8x512xf32> -> vector<8x512xf32>
    %11 = arith.addf %9, %10 : vector<8x512xf32>
    %12 = vector.extract_strided_slice %11 {offsets = [0, 0], sizes = [8, 384], strides = [1, 1]} : vector<8x512xf32> to vector<8x384xf32>
    %13 = arith.negf %12 : vector<8x384xf32>
    %14 = math.exp %13 : vector<8x384xf32>
    %cst_10 = arith.constant 1.000000e+00 : f32
    %15 = vector.broadcast %cst_10 : f32 to vector<8x384xf32>
    %16 = arith.addf %15, %14 : vector<8x384xf32>
    %17 = arith.divf %15, %16 : vector<8x384xf32>
    %18 = vector.extract_strided_slice %11 {offsets = [0, 384], sizes = [8, 128], strides = [1, 1]} : vector<8x512xf32> to vector<8x128xf32>
    %19 = math.tanh %18 : vector<8x128xf32>
    %20 = vector.extract_strided_slice %17 {offsets = [0, 0], sizes = [8, 128], strides = [1, 1]} : vector<8x384xf32> to vector<8x128xf32>
    %21 = vector.extract_strided_slice %17 {offsets = [0, 128], sizes = [8, 128], strides = [1, 1]} : vector<8x384xf32> to vector<8x128xf32>
    %22 = vector.extract_strided_slice %17 {offsets = [0, 256], sizes = [8, 128], strides = [1, 1]} : vector<8x384xf32> to vector<8x128xf32>
    %23 = arith.mulf %21, %8 : vector<8x128xf32>
    %24 = arith.mulf %20, %19 : vector<8x128xf32>
    %25 = arith.addf %23, %24 : vector<8x128xf32>
    %26 = math.tanh %25 : vector<8x128xf32>
    %27 = arith.mulf %22, %26 : vector<8x128xf32>
    %28 = vector.extract_strided_slice %5 {offsets = [8, 0], sizes = [8, 512], strides = [1, 1]} : vector<64x512xf32> to vector<8x512xf32>
    %cst_11 = arith.constant dense<0.000000e+00> : vector<8x512xf32>
    %29 = tpu.matmul %27, %6, %cst_11 {dimension_numbers = #tpu.dot_dimension_numbers<[1], [0], [0], [1], [0, 0, 1, 1], [], []>} : vector<8x128xf32>, vector<128x512xf32>, vector<8x512xf32> -> vector<8x512xf32>
    %30 = arith.addf %28, %29 : vector<8x512xf32>
    %31 = vector.extract_strided_slice %30 {offsets = [0, 0], sizes = [8, 384], strides = [1, 1]} : vector<8x512xf32> to vector<8x384xf32>
    %32 = arith.negf %31 : vector<8x384xf32>
    %33 = math.exp %32 : vector<8x384xf32>
    %cst_12 = arith.constant 1.000000e+00 : f32
    %34 = vector.broadcast %cst_12 : f32 to vector<8x384xf32>
    %35 = arith.addf %34, %33 : vector<8x384xf32>
    %36 = arith.divf %34, %35 : vector<8x384xf32>
    %37 = vector.extract_strided_slice %30 {offsets = [0, 384], sizes = [8, 128], strides = [1, 1]} : vector<8x512xf32> to vector<8x128xf32>
    %38 = math.tanh %37 : vector<8x128xf32>
    %39 = vector.extract_strided_slice %36 {offsets = [0, 0], sizes = [8, 128], strides = [1, 1]} : vector<8x384xf32> to vector<8x128xf32>
    %40 = vector.extract_strided_slice %36 {offsets = [0, 128], sizes = [8, 128], strides = [1, 1]} : vector<8x384xf32> to vector<8x128xf32>
    %41 = vector.extract_strided_slice %36 {offsets = [0, 256], sizes = [8, 128], strides = [1, 1]} : vector<8x384xf32> to vector<8x128xf32>
    %42 = arith.mulf %40, %25 : vector<8x128xf32>
    %43 = arith.mulf %39, %38 : vector<8x128xf32>
    %44 = arith.addf %42, %43 : vector<8x128xf32>
    %45 = math.tanh %44 : vector<8x128xf32>
    %46 = arith.mulf %41, %45 : vector<8x128xf32>
    %47 = vector.extract_strided_slice %5 {offsets = [16, 0], sizes = [8, 512], strides = [1, 1]} : vector<64x512xf32> to vector<8x512xf32>
    %cst_13 = arith.constant dense<0.000000e+00> : vector<8x512xf32>
    %48 = tpu.matmul %46, %6, %cst_13 {dimension_numbers = #tpu.dot_dimension_numbers<[1], [0], [0], [1], [0, 0, 1, 1], [], []>} : vector<8x128xf32>, vector<128x512xf32>, vector<8x512xf32> -> vector<8x512xf32>
    %49 = arith.addf %47, %48 : vector<8x512xf32>
    %50 = vector.extract_strided_slice %49 {offsets = [0, 0], sizes = [8, 384], strides = [1, 1]} : vector<8x512xf32> to vector<8x384xf32>
    %51 = arith.negf %50 : vector<8x384xf32>
    %52 = math.exp %51 : vector<8x384xf32>
    %cst_14 = arith.constant 1.000000e+00 : f32
    %53 = vector.broadcast %cst_14 : f32 to vector<8x384xf32>
    %54 = arith.addf %53, %52 : vector<8x384xf32>
    %55 = arith.divf %53, %54 : vector<8x384xf32>
    %56 = vector.extract_strided_slice %49 {offsets = [0, 384], sizes = [8, 128], strides = [1, 1]} : vector<8x512xf32> to vector<8x128xf32>
    %57 = math.tanh %56 : vector<8x128xf32>
    %58 = vector.extract_strided_slice %55 {offsets = [0, 0], sizes = [8, 128], strides = [1, 1]} : vector<8x384xf32> to vector<8x128xf32>
    %59 = vector.extract_strided_slice %55 {offsets = [0, 128], sizes = [8, 128], strides = [1, 1]} : vector<8x384xf32> to vector<8x128xf32>
    %60 = vector.extract_strided_slice %55 {offsets = [0, 256], sizes = [8, 128], strides = [1, 1]} : vector<8x384xf32> to vector<8x128xf32>
    %61 = arith.mulf %59, %44 : vector<8x128xf32>
    %62 = arith.mulf %58, %57 : vector<8x128xf32>
    %63 = arith.addf %61, %62 : vector<8x128xf32>
    %64 = math.tanh %63 : vector<8x128xf32>
    %65 = arith.mulf %60, %64 : vector<8x128xf32>
    %66 = vector.extract_strided_slice %5 {offsets = [24, 0], sizes = [8, 512], strides = [1, 1]} : vector<64x512xf32> to vector<8x512xf32>
    %cst_15 = arith.constant dense<0.000000e+00> : vector<8x512xf32>
    %67 = tpu.matmul %65, %6, %cst_15 {dimension_numbers = #tpu.dot_dimension_numbers<[1], [0], [0], [1], [0, 0, 1, 1], [], []>} : vector<8x128xf32>, vector<128x512xf32>, vector<8x512xf32> -> vector<8x512xf32>
    %68 = arith.addf %66, %67 : vector<8x512xf32>
    %69 = vector.extract_strided_slice %68 {offsets = [0, 0], sizes = [8, 384], strides = [1, 1]} : vector<8x512xf32> to vector<8x384xf32>
    %70 = arith.negf %69 : vector<8x384xf32>
    %71 = math.exp %70 : vector<8x384xf32>
    %cst_16 = arith.constant 1.000000e+00 : f32
    %72 = vector.broadcast %cst_16 : f32 to vector<8x384xf32>
    %73 = arith.addf %72, %71 : vector<8x384xf32>
    %74 = arith.divf %72, %73 : vector<8x384xf32>
    %75 = vector.extract_strided_slice %68 {offsets = [0, 384], sizes = [8, 128], strides = [1, 1]} : vector<8x512xf32> to vector<8x128xf32>
    %76 = math.tanh %75 : vector<8x128xf32>
    %77 = vector.extract_strided_slice %74 {offsets = [0, 0], sizes = [8, 128], strides = [1, 1]} : vector<8x384xf32> to vector<8x128xf32>
    %78 = vector.extract_strided_slice %74 {offsets = [0, 128], sizes = [8, 128], strides = [1, 1]} : vector<8x384xf32> to vector<8x128xf32>
    %79 = vector.extract_strided_slice %74 {offsets = [0, 256], sizes = [8, 128], strides = [1, 1]} : vector<8x384xf32> to vector<8x128xf32>
    %80 = arith.mulf %78, %63 : vector<8x128xf32>
    %81 = arith.mulf %77, %76 : vector<8x128xf32>
    %82 = arith.addf %80, %81 : vector<8x128xf32>
    %83 = math.tanh %82 : vector<8x128xf32>
    %84 = arith.mulf %79, %83 : vector<8x128xf32>
    %85 = vector.extract_strided_slice %5 {offsets = [32, 0], sizes = [8, 512], strides = [1, 1]} : vector<64x512xf32> to vector<8x512xf32>
    %cst_17 = arith.constant dense<0.000000e+00> : vector<8x512xf32>
    %86 = tpu.matmul %84, %6, %cst_17 {dimension_numbers = #tpu.dot_dimension_numbers<[1], [0], [0], [1], [0, 0, 1, 1], [], []>} : vector<8x128xf32>, vector<128x512xf32>, vector<8x512xf32> -> vector<8x512xf32>
    %87 = arith.addf %85, %86 : vector<8x512xf32>
    %88 = vector.extract_strided_slice %87 {offsets = [0, 0], sizes = [8, 384], strides = [1, 1]} : vector<8x512xf32> to vector<8x384xf32>
    %89 = arith.negf %88 : vector<8x384xf32>
    %90 = math.exp %89 : vector<8x384xf32>
    %cst_18 = arith.constant 1.000000e+00 : f32
    %91 = vector.broadcast %cst_18 : f32 to vector<8x384xf32>
    %92 = arith.addf %91, %90 : vector<8x384xf32>
    %93 = arith.divf %91, %92 : vector<8x384xf32>
    %94 = vector.extract_strided_slice %87 {offsets = [0, 384], sizes = [8, 128], strides = [1, 1]} : vector<8x512xf32> to vector<8x128xf32>
    %95 = math.tanh %94 : vector<8x128xf32>
    %96 = vector.extract_strided_slice %93 {offsets = [0, 0], sizes = [8, 128], strides = [1, 1]} : vector<8x384xf32> to vector<8x128xf32>
    %97 = vector.extract_strided_slice %93 {offsets = [0, 128], sizes = [8, 128], strides = [1, 1]} : vector<8x384xf32> to vector<8x128xf32>
    %98 = vector.extract_strided_slice %93 {offsets = [0, 256], sizes = [8, 128], strides = [1, 1]} : vector<8x384xf32> to vector<8x128xf32>
    %99 = arith.mulf %97, %82 : vector<8x128xf32>
    %100 = arith.mulf %96, %95 : vector<8x128xf32>
    %101 = arith.addf %99, %100 : vector<8x128xf32>
    %102 = math.tanh %101 : vector<8x128xf32>
    %103 = arith.mulf %98, %102 : vector<8x128xf32>
    %104 = vector.extract_strided_slice %5 {offsets = [40, 0], sizes = [8, 512], strides = [1, 1]} : vector<64x512xf32> to vector<8x512xf32>
    %cst_19 = arith.constant dense<0.000000e+00> : vector<8x512xf32>
    %105 = tpu.matmul %103, %6, %cst_19 {dimension_numbers = #tpu.dot_dimension_numbers<[1], [0], [0], [1], [0, 0, 1, 1], [], []>} : vector<8x128xf32>, vector<128x512xf32>, vector<8x512xf32> -> vector<8x512xf32>
    %106 = arith.addf %104, %105 : vector<8x512xf32>
    %107 = vector.extract_strided_slice %106 {offsets = [0, 0], sizes = [8, 384], strides = [1, 1]} : vector<8x512xf32> to vector<8x384xf32>
    %108 = arith.negf %107 : vector<8x384xf32>
    %109 = math.exp %108 : vector<8x384xf32>
    %cst_20 = arith.constant 1.000000e+00 : f32
    %110 = vector.broadcast %cst_20 : f32 to vector<8x384xf32>
    %111 = arith.addf %110, %109 : vector<8x384xf32>
    %112 = arith.divf %110, %111 : vector<8x384xf32>
    %113 = vector.extract_strided_slice %106 {offsets = [0, 384], sizes = [8, 128], strides = [1, 1]} : vector<8x512xf32> to vector<8x128xf32>
    %114 = math.tanh %113 : vector<8x128xf32>
    %115 = vector.extract_strided_slice %112 {offsets = [0, 0], sizes = [8, 128], strides = [1, 1]} : vector<8x384xf32> to vector<8x128xf32>
    %116 = vector.extract_strided_slice %112 {offsets = [0, 128], sizes = [8, 128], strides = [1, 1]} : vector<8x384xf32> to vector<8x128xf32>
    %117 = vector.extract_strided_slice %112 {offsets = [0, 256], sizes = [8, 128], strides = [1, 1]} : vector<8x384xf32> to vector<8x128xf32>
    %118 = arith.mulf %116, %101 : vector<8x128xf32>
    %119 = arith.mulf %115, %114 : vector<8x128xf32>
    %120 = arith.addf %118, %119 : vector<8x128xf32>
    %121 = math.tanh %120 : vector<8x128xf32>
    %122 = arith.mulf %117, %121 : vector<8x128xf32>
    %123 = vector.extract_strided_slice %5 {offsets = [48, 0], sizes = [8, 512], strides = [1, 1]} : vector<64x512xf32> to vector<8x512xf32>
    %cst_21 = arith.constant dense<0.000000e+00> : vector<8x512xf32>
    %124 = tpu.matmul %122, %6, %cst_21 {dimension_numbers = #tpu.dot_dimension_numbers<[1], [0], [0], [1], [0, 0, 1, 1], [], []>} : vector<8x128xf32>, vector<128x512xf32>, vector<8x512xf32> -> vector<8x512xf32>
    %125 = arith.addf %123, %124 : vector<8x512xf32>
    %126 = vector.extract_strided_slice %125 {offsets = [0, 0], sizes = [8, 384], strides = [1, 1]} : vector<8x512xf32> to vector<8x384xf32>
    %127 = arith.negf %126 : vector<8x384xf32>
    %128 = math.exp %127 : vector<8x384xf32>
    %cst_22 = arith.constant 1.000000e+00 : f32
    %129 = vector.broadcast %cst_22 : f32 to vector<8x384xf32>
    %130 = arith.addf %129, %128 : vector<8x384xf32>
    %131 = arith.divf %129, %130 : vector<8x384xf32>
    %132 = vector.extract_strided_slice %125 {offsets = [0, 384], sizes = [8, 128], strides = [1, 1]} : vector<8x512xf32> to vector<8x128xf32>
    %133 = math.tanh %132 : vector<8x128xf32>
    %134 = vector.extract_strided_slice %131 {offsets = [0, 0], sizes = [8, 128], strides = [1, 1]} : vector<8x384xf32> to vector<8x128xf32>
    %135 = vector.extract_strided_slice %131 {offsets = [0, 128], sizes = [8, 128], strides = [1, 1]} : vector<8x384xf32> to vector<8x128xf32>
    %136 = vector.extract_strided_slice %131 {offsets = [0, 256], sizes = [8, 128], strides = [1, 1]} : vector<8x384xf32> to vector<8x128xf32>
    %137 = arith.mulf %135, %120 : vector<8x128xf32>
    %138 = arith.mulf %134, %133 : vector<8x128xf32>
    %139 = arith.addf %137, %138 : vector<8x128xf32>
    %140 = math.tanh %139 : vector<8x128xf32>
    %141 = arith.mulf %136, %140 : vector<8x128xf32>
    %142 = vector.extract_strided_slice %5 {offsets = [56, 0], sizes = [8, 512], strides = [1, 1]} : vector<64x512xf32> to vector<8x512xf32>
    %cst_23 = arith.constant dense<0.000000e+00> : vector<8x512xf32>
    %143 = tpu.matmul %141, %6, %cst_23 {dimension_numbers = #tpu.dot_dimension_numbers<[1], [0], [0], [1], [0, 0, 1, 1], [], []>} : vector<8x128xf32>, vector<128x512xf32>, vector<8x512xf32> -> vector<8x512xf32>
    %144 = arith.addf %142, %143 : vector<8x512xf32>
    %145 = vector.extract_strided_slice %144 {offsets = [0, 0], sizes = [8, 384], strides = [1, 1]} : vector<8x512xf32> to vector<8x384xf32>
    %146 = arith.negf %145 : vector<8x384xf32>
    %147 = math.exp %146 : vector<8x384xf32>
    %cst_24 = arith.constant 1.000000e+00 : f32
    %148 = vector.broadcast %cst_24 : f32 to vector<8x384xf32>
    %149 = arith.addf %148, %147 : vector<8x384xf32>
    %150 = arith.divf %148, %149 : vector<8x384xf32>
    %151 = vector.extract_strided_slice %144 {offsets = [0, 384], sizes = [8, 128], strides = [1, 1]} : vector<8x512xf32> to vector<8x128xf32>
    %152 = math.tanh %151 : vector<8x128xf32>
    %153 = vector.extract_strided_slice %150 {offsets = [0, 0], sizes = [8, 128], strides = [1, 1]} : vector<8x384xf32> to vector<8x128xf32>
    %154 = vector.extract_strided_slice %150 {offsets = [0, 128], sizes = [8, 128], strides = [1, 1]} : vector<8x384xf32> to vector<8x128xf32>
    %155 = vector.extract_strided_slice %150 {offsets = [0, 256], sizes = [8, 128], strides = [1, 1]} : vector<8x384xf32> to vector<8x128xf32>
    %156 = arith.mulf %154, %139 : vector<8x128xf32>
    %157 = arith.mulf %153, %152 : vector<8x128xf32>
    %158 = arith.addf %156, %157 : vector<8x128xf32>
    %159 = math.tanh %158 : vector<8x128xf32>
    %160 = arith.mulf %155, %159 : vector<8x128xf32>
    %c0_25 = arith.constant 0 : index
    %c0_26 = arith.constant 0 : index
    %161 = vector.load %arg4[%c0_25, %c0_26] : memref<1x128xf32, #tpu.memory_space<vmem>>, vector<1x128xf32>
    %162 = vector.broadcast %161 : vector<1x128xf32> to vector<8x128xf32>
    %163 = arith.mulf %160, %162 : vector<8x128xf32>
    %cst_27 = arith.constant dense<0.000000e+00> : vector<8xf32>
    %164 = vector.multi_reduction <add>, %163, %cst_27 [1] : vector<8x128xf32> to vector<8xf32>
    %165 = vector.shape_cast %164 : vector<8xf32> to vector<8x1xf32>
    %c0_28 = arith.constant 0 : index
    %c0_29 = arith.constant 0 : index
    %166 = vector.load %arg5[%c0_28, %c0_29] : memref<1x1xf32, #tpu.memory_space<vmem>>, vector<1x1xf32>
    %167 = vector.broadcast %166 : vector<1x1xf32> to vector<8x1xf32>
    %168 = arith.addf %165, %167 : vector<8x1xf32>
    %c0_30 = arith.constant 0 : index
    %c0_31 = arith.constant 0 : index
    %169 = vector.load %arg6[%c0_30, %c0_31] : memref<8x1xf32, #tpu.memory_space<vmem>>, vector<8x1xf32>
    tpu.vector_store %arg6[%c0_30, %c0_31], %168 {strides = array<i32>} : memref<8x1xf32, #tpu.memory_space<vmem>>, vector<8x1xf32>,
    return
  }
}

</mosaic_0001>

<llo_original>
// kernel: rnn_model_forward.1
$region0: #{rnn_model_forward.1}
  #allocation0 [shape = 'u32[]', space=smem, size = 0x4, offset = 0x4, fixed_abs, tag = 'smem constant byte address 0x4 - core index']
  #allocation1 [shape = 'u32[144,128]{1,0:T(1,128)}', space=vmem, size = 0x12000, scoped, tag = 'internal scratch']
  #allocation2 [shape = 'f32[1,1]{1,0:T(1,128)S(1)}', space=vmem, size = 0x200, scoped, tag = 'scoped memory for rnn_model_forward.1']
  %s0 = inlined_call_operand.vmem [shape: f32[64,5], index: 0, kind: input, shape index: {}]
  %s1 = inlined_call_operand.vmem [shape: f32[5,512], index: 1, kind: input, shape index: {}]
  %s2 = inlined_call_operand.vmem [shape: f32[1,512], index: 2, kind: input, shape index: {}]
  %s3 = inlined_call_operand.hbm [shape: f32[128,512], index: 3, kind: input, shape index: {}]
  %s4 = inlined_call_operand.vmem [shape: f32[1,128], index: 4, kind: input, shape index: {}]
  %s5 = inlined_call_operand.<no memory space> [shape: f32[1,1], index: 5, kind: input, shape index: {}]
  %s6 = inlined_call_operand.vmem [shape: f32[8,1], index: 6, kind: output, shape index: {}]
  %s7 = sld [smem:[#allocation0]]
  $region38: #{rnn_model_forward.1} parent=0
    _
  %s9 = ssub.s32 1, %s7
  %s10 = scalar_select 0, %s9, %s7
  %v11 = vstv %s5
  %12 = vst [vmem:[#allocation2] sm:$0x1] %v11
  $region1: #{rnn_model_forward.1} parent=0
    #allocation3 [shape = 'u8[262144]{0}', space=vmem, size = 0x40000, scoped, tag = 'input window, operand 3, single buffered']
    #allocation4 [shape = 's32[1]{0}', space=sflag, size = 0x4, scoped, tag = 'scoped memory for rnn_model_forward.1']
    %13 = vsyncpa [#allocation4], 0
    // Predicated region
    $region2: #{rnn_model_forward.1} parent=1 // pred_check
      _
    $region3: #{rnn_model_forward.1} parent=1 // pred_check_branch
      %15 = sbr.rel (0) target = $region5
    $region4: #{rnn_model_forward.1} parent=1 // pred_region
      _
    $region5: #{rnn_model_forward.1} parent=1 // pred_fallthru
      _
    // Predicated region
    $region6: #{rnn_model_forward.1} parent=1 // pred_check
      _
    $region7: #{rnn_model_forward.1} parent=1 // pred_check_branch
      %17 = sbr.rel (0) target = $region9
    $region8: #{rnn_model_forward.1} parent=1 // pred_region
      _
    $region9: #{rnn_model_forward.1} parent=1 // pred_fallthru
      _
    // Predicated region
    $region10: #{rnn_model_forward.1} parent=1 // pred_check
      _
    $region11: #{rnn_model_forward.1} parent=1 // pred_check_branch
      %19 = sbr.rel (0) target = $region13
    $region12: #{rnn_model_forward.1} parent=1 // pred_region
      _
    $region13: #{rnn_model_forward.1} parent=1 // pred_fallthru
      _
    // Predicated region
    $region14: #{rnn_model_forward.1} parent=1 // pred_check
      _
    $region15: #{rnn_model_forward.1} parent=1 // pred_check_branch
      %21 = sbr.rel (0) target = $region17
    $region16: #{rnn_model_forward.1} parent=1 // pred_region
      %s23 = ssub.s32 8192, 8192
      %24 = vsyncadd [#allocation4], %s23
      %s25 = sshll.u32 [#allocation3], 4
      %s26 = int_to_ptr.vmem [resolvable:$true] %s25
      %31 = dma.hbm_to_vmem [thread:$0]  %s3, 8192, %s26, [#allocation4], 512, 512, 32
    $region17: #{rnn_model_forward.1} parent=1 // pred_fallthru
      _
    // Predicated region
    $region18: #{rnn_model_forward.1} parent=1 // pred_check
      _
    $region19: #{rnn_model_forward.1} parent=1 // pred_check_branch
      %33 = sbr.rel (0) target = $region21
    $region20: #{rnn_model_forward.1} parent=1 // pred_region
      _
    $region21: #{rnn_model_forward.1} parent=1 // pred_fallthru
      _
    // Predicated region
    $region22: #{rnn_model_forward.1} parent=1 // pred_check
      _
    $region23: #{rnn_model_forward.1} parent=1 // pred_check_branch
      %35 = sbr.rel (0) target = $region25
    $region24: #{rnn_model_forward.1} parent=1 // pred_region
      _
    $region25: #{rnn_model_forward.1} parent=1 // pred_fallthru
      _
    // Predicated region
    $region26: #{rnn_model_forward.1} parent=1 // pred_check
      _
    $region27: #{rnn_model_forward.1} parent=1 // pred_check_branch
      %37 = sbr.rel (0) target = $region29
    $region28: #{rnn_model_forward.1} parent=1 // pred_region
      %38 = dma.done [#allocation4], 8192
    $region29: #{rnn_model_forward.1} parent=1 // pred_fallthru
      _
    %v39 = vld [vmem:[%s0] sm:$0xff]
    %v40 = vld [vmem:[%s0 + $0x8] sm:$0xff]
    %v41 = vld [vmem:[%s0 + $0x10] sm:$0xff]
    %v42 = vld [vmem:[%s0 + $0x18] sm:$0xff]
    %v43 = vld [vmem:[%s0 + $0x20] sm:$0xff]
    %v44 = vld [vmem:[%s0 + $0x28] sm:$0xff]
    %v45 = vld [vmem:[%s0 + $0x30] sm:$0xff]
    %v46 = vld [vmem:[%s0 + $0x38] sm:$0xff]
    %v47 = vld [vmem:[%s1] sm:$0x1f]
    %v48 = vld [vmem:[%s1 + $0x8] sm:$0x1f]
    %v49 = vld [vmem:[%s1 + $0x10] sm:$0x1f]
    %v50 = vld [vmem:[%s1 + $0x18] sm:$0x1f]
    %v51 = vld [vmem:[%s2] sm:$0xf]
    %v53 = vlaneseq
    %v54 = vshrl.u32 %v53, 7
    %v55 = vsub.s32 0, %v54
    %v56 = vrot.slane %v51, %v55
    %v57 = vlaneseq
    %v58 = vshrl.u32 %v57, 7
    %v59 = vsub.s32 1, %v58
    %v60 = vrot.slane %v51, %v59
    %v61 = vlaneseq
    %v62 = vshrl.u32 %v61, 7
    %v63 = vsub.s32 2, %v62
    %v64 = vrot.slane %v51, %v63
    %v65 = vlaneseq
    %v66 = vshrl.u32 %v65, 7
    %v67 = vsub.s32 3, %v66
    %v68 = vrot.slane %v51, %v67
    %vm73 = vcmask 39936
    %v75 = vsel %vm73, %v39, 0
    %v78 = vsel %vm73, %v40, 0
    %v81 = vsel %vm73, %v41, 0
    %v84 = vsel %vm73, %v42, 0
    %v87 = vsel %vm73, %v43, 0
    %v90 = vsel %vm73, %v44, 0
    %v93 = vsel %vm73, %v45, 0
    %v96 = vsel %vm73, %v46, 0
    %vm98 = vcmask 1044480
    %v100 = vsel %vm98, %v47, 0
    %v103 = vsel %vm98, %v48, 0
    %v106 = vsel %vm98, %v49, 0
    %v109 = vsel %vm98, %v50, 0
    %111 = vmatprep.subr.mxu0 %v103
    %112 = vmatpush1.msra.mxu0 %v100
    %113 = vmatprep.subr.mxu0 0.0
    %114 = vmatpush1.msra.mxu0 0.0
    %115 = vmatprep.subr.mxu0 0.0
    %116 = vmatpush1.msra.mxu0 0.0
    %117 = vmatprep.subr.mxu0 0.0
    %118 = vmatpush1.msra.mxu0 0.0
    %119 = vmatprep.subr.mxu0 0.0
    %120 = vmatpush1.msra.mxu0 0.0
    %121 = vmatprep.subr.mxu0 0.0
    %122 = vmatpush1.msra.mxu0 0.0
    %123 = vmatprep.subr.mxu0 0.0
    %124 = vmatpush1.msra.mxu0 0.0
    %125 = vmatprep.subr.mxu0 0.0
    %126 = vmatpush1.msra.mxu0 0.0
    %127 = vmatprep.subr.mxu0 0.0
    %128 = vmatpush1.msra.mxu0 0.0
    %129 = vmatprep.subr.mxu0 0.0
    %130 = vmatpush1.msra.mxu0 0.0
    %131 = vmatprep.subr.mxu0 0.0
    %132 = vmatpush1.msra.mxu0 0.0
    %133 = vmatprep.subr.mxu0 0.0
    %134 = vmatpush1.msra.mxu0 0.0
    %135 = vmatprep.subr.mxu0 0.0
    %136 = vmatpush1.msra.mxu0 0.0
    %137 = vmatprep.subr.mxu0 0.0
    %138 = vmatpush1.msra.mxu0 0.0
    %139 = vmatprep.subr.mxu0 0.0
    %140 = vmatpush1.msra.mxu0 0.0
    %141 = vmatprep.subr.mxu0 0.0
    %142 = vmatpush1.msra.mxu0 0.0
    %143 = vmatprep.subr.mxu0 0.0
    %144 = vmatpush1.msra.mxu0 0.0
    %145 = vmatprep.subr.mxu0 0.0
    %146 = vmatpush1.msra.mxu0 0.0
    %147 = vmatprep.subr.mxu0 0.0
    %148 = vmatpush1.msra.mxu0 0.0
    %149 = vmatprep.subr.mxu0 0.0
    %150 = vmatpush1.msra.mxu0 0.0
    %151 = vmatprep.subr.mxu0 0.0
    %152 = vmatpush1.msra.mxu0 0.0
    %153 = vmatprep.subr.mxu0 0.0
    %154 = vmatpush1.msra.mxu0 0.0
    %155 = vmatprep.subr.mxu0 0.0
    %156 = vmatpush1.msra.mxu0 0.0
    %157 = vmatprep.subr.mxu0 0.0
    %158 = vmatpush1.msra.mxu0 0.0
    %159 = vmatprep.subr.mxu0 0.0
    %160 = vmatpush1.msra.mxu0 0.0
    %161 = vmatprep.subr.mxu0 0.0
    %162 = vmatpush1.msra.mxu0 0.0
    %163 = vmatprep.subr.mxu0 0.0
    %164 = vmatpush1.msra.mxu0 0.0
    %165 = vmatprep.subr.mxu0 0.0
    %166 = vmatpush1.msra.mxu0 0.0
    %167 = vmatprep.subr.mxu0 0.0
    %168 = vmatpush1.msra.mxu0 0.0
    %169 = vmatprep.subr.mxu0 0.0
    %170 = vmatpush1.msra.mxu0 0.0
    %171 = vmatprep.subr.mxu0 0.0
    %172 = vmatpush1.msra.mxu0 0.0
    %173 = vmatprep.subr.mxu0 0.0
    %174 = vmatpush1.msra.mxu0 0.0
    %175 = vmatprep.mubr.f32.mxu0 0.0
    %176 = vmatmul.mubr.f32.gmra.mrb[0].mxu0 %v75
    %v177 = vpop.f32.mrb[0].mxu0
    %v178 = vadd.f32 %v56, %v177
    %v179 = vpop.f32.mrb[0].mxu0
    %v180 = vadd.f32 %v60, %v179
    %181 = vmatprep.mubr.f32.mxu0 0.0
    %182 = vmatmul.mubr.f32.gmra.mrb[0].mxu0 %v78
    %v183 = vpop.f32.mrb[0].mxu0
    %v184 = vadd.f32 %v56, %v183
    %v185 = vpop.f32.mrb[0].mxu0
    %v186 = vadd.f32 %v60, %v185
    %187 = vmatprep.mubr.f32.mxu0 0.0
    %188 = vmatmul.mubr.f32.gmra.mrb[0].mxu0 %v81
    %v189 = vpop.f32.mrb[0].mxu0
    %v190 = vadd.f32 %v56, %v189
    %v191 = vpop.f32.mrb[0].mxu0
    %v192 = vadd.f32 %v60, %v191
    %193 = vmatprep.mubr.f32.mxu0 0.0
    %194 = vmatmul.mubr.f32.gmra.mrb[0].mxu0 %v84
    %v195 = vpop.f32.mrb[0].mxu0
    %v196 = vadd.f32 %v56, %v195
    %v197 = vpop.f32.mrb[0].mxu0
    %v198 = vadd.f32 %v60, %v197
    %199 = vmatprep.mubr.f32.mxu0 0.0
    %200 = vmatmul.mubr.f32.gmra.mrb[0].mxu0 %v87
    %v201 = vpop.f32.mrb[0].mxu0
    %v202 = vadd.f32 %v56, %v201
    %v203 = vpop.f32.mrb[0].mxu0
    %v204 = vadd.f32 %v60, %v203
    %205 = vmatprep.mubr.f32.mxu0 0.0
    %206 = vmatmul.mubr.f32.gmra.mrb[0].mxu0 %v90
    %v207 = vpop.f32.mrb[0].mxu0
    %v208 = vadd.f32 %v56, %v207
    %v209 = vpop.f32.mrb[0].mxu0
    %v210 = vadd.f32 %v60, %v209
    %211 = vmatprep.mubr.f32.mxu0 0.0
    %212 = vmatmul.mubr.f32.gmra.mrb[0].mxu0 %v93
    %v213 = vpop.f32.mrb[0].mxu0
    %v214 = vadd.f32 %v56, %v213
    %v215 = vpop.f32.mrb[0].mxu0
    %v216 = vadd.f32 %v60, %v215
    %217 = vmatprep.mubr.f32.mxu0 0.0
    %218 = vmatmul.mubr.f32.gmra.mrb[0].mxu0 %v96
    %v219 = vpop.f32.mrb[0].mxu0
    %v220 = vadd.f32 %v56, %v219
    %v221 = vpop.f32.mrb[0].mxu0
    %v222 = vadd.f32 %v60, %v221
    %223 = vdwg.mxu0
    %224 = vmatprep.subr.mxu0 %v109
    %225 = vmatpush1.msra.mxu0 %v106
    %226 = vmatprep.subr.mxu0 0.0
    %227 = vmatpush1.msra.mxu0 0.0
    %228 = vmatprep.subr.mxu0 0.0
    %229 = vmatpush1.msra.mxu0 0.0
    %230 = vmatprep.subr.mxu0 0.0
    %231 = vmatpush1.msra.mxu0 0.0
    %232 = vmatprep.subr.mxu0 0.0
    %233 = vmatpush1.msra.mxu0 0.0
    %234 = vmatprep.subr.mxu0 0.0
    %235 = vmatpush1.msra.mxu0 0.0
    %236 = vmatprep.subr.mxu0 0.0
    %237 = vmatpush1.msra.mxu0 0.0
    %238 = vmatprep.subr.mxu0 0.0
    %239 = vmatpush1.msra.mxu0 0.0
    %240 = vmatprep.subr.mxu0 0.0
    %241 = vmatpush1.msra.mxu0 0.0
    %242 = vmatprep.subr.mxu0 0.0
    %243 = vmatpush1.msra.mxu0 0.0
    %244 = vmatprep.subr.mxu0 0.0
    %245 = vmatpush1.msra.mxu0 0.0
    %246 = vmatprep.subr.mxu0 0.0
    %247 = vmatpush1.msra.mxu0 0.0
    %248 = vmatprep.subr.mxu0 0.0
    %249 = vmatpush1.msra.mxu0 0.0
    %250 = vmatprep.subr.mxu0 0.0
    %251 = vmatpush1.msra.mxu0 0.0
    %252 = vmatprep.subr.mxu0 0.0
    %253 = vmatpush1.msra.mxu0 0.0
    %254 = vmatprep.subr.mxu0 0.0
    %255 = vmatpush1.msra.mxu0 0.0
    %256 = vmatprep.subr.mxu0 0.0
    %257 = vmatpush1.msra.mxu0 0.0
    %258 = vmatprep.subr.mxu0 0.0
    %259 = vmatpush1.msra.mxu0 0.0
    %260 = vmatprep.subr.mxu0 0.0
    %261 = vmatpush1.msra.mxu0 0.0
    %262 = vmatprep.subr.mxu0 0.0
    %263 = vmatpush1.msra.mxu0 0.0
    %264 = vmatprep.subr.mxu0 0.0
    %265 = vmatpush1.msra.mxu0 0.0
    %266 = vmatprep.subr.mxu0 0.0
    %267 = vmatpush1.msra.mxu0 0.0
    %268 = vmatprep.subr.mxu0 0.0
    %269 = vmatpush1.msra.mxu0 0.0
    %270 = vmatprep.subr.mxu0 0.0
    %271 = vmatpush1.msra.mxu0 0.0
    %272 = vmatprep.subr.mxu0 0.0
    %273 = vmatpush1.msra.mxu0 0.0
    %274 = vmatprep.subr.mxu0 0.0
    %275 = vmatpush1.msra.mxu0 0.0
    %276 = vmatprep.subr.mxu0 0.0
    %277 = vmatpush1.msra.mxu0 0.0
    %278 = vmatprep.subr.mxu0 0.0
    %279 = vmatpush1.msra.mxu0 0.0
    %280 = vmatprep.subr.mxu0 0.0
    %281 = vmatpush1.msra.mxu0 0.0
    %282 = vmatprep.subr.mxu0 0.0
    %283 = vmatpush1.msra.mxu0 0.0
    %284 = vmatprep.subr.mxu0 0.0
    %285 = vmatpush1.msra.mxu0 0.0
    %286 = vmatprep.subr.mxu0 0.0
    %287 = vmatpush1.msra.mxu0 0.0
    %288 = vmatprep.mubr.f32.mxu0 0.0
    %289 = vmatmul.mubr.f32.gmra.mrb[0].mxu0 %v75
    %v290 = vpop.f32.mrb[0].mxu0
    %v291 = vadd.f32 %v64, %v290
    %v292 = vpop.f32.mrb[0].mxu0
    %v293 = vadd.f32 %v68, %v292
    %294 = vmatprep.mubr.f32.mxu0 0.0
    %295 = vmatmul.mubr.f32.gmra.mrb[0].mxu0 %v78
    %v296 = vpop.f32.mrb[0].mxu0
    %v297 = vadd.f32 %v64, %v296
    %v298 = vpop.f32.mrb[0].mxu0
    %v299 = vadd.f32 %v68, %v298
    %300 = vmatprep.mubr.f32.mxu0 0.0
    %301 = vmatmul.mubr.f32.gmra.mrb[0].mxu0 %v81
    %v302 = vpop.f32.mrb[0].mxu0
    %v303 = vadd.f32 %v64, %v302
    %v304 = vpop.f32.mrb[0].mxu0
    %v305 = vadd.f32 %v68, %v304
    %306 = vmatprep.mubr.f32.mxu0 0.0
    %307 = vmatmul.mubr.f32.gmra.mrb[0].mxu0 %v84
    %v308 = vpop.f32.mrb[0].mxu0
    %v309 = vadd.f32 %v64, %v308
    %v310 = vpop.f32.mrb[0].mxu0
    %v311 = vadd.f32 %v68, %v310
    %312 = vmatprep.mubr.f32.mxu0 0.0
    %313 = vmatmul.mubr.f32.gmra.mrb[0].mxu0 %v87
    %v314 = vpop.f32.mrb[0].mxu0
    %v315 = vadd.f32 %v64, %v314
    %v316 = vpop.f32.mrb[0].mxu0
    %v317 = vadd.f32 %v68, %v316
    %318 = vmatprep.mubr.f32.mxu0 0.0
    %319 = vmatmul.mubr.f32.gmra.mrb[0].mxu0 %v90
    %v320 = vpop.f32.mrb[0].mxu0
    %v321 = vadd.f32 %v64, %v320
    %v322 = vpop.f32.mrb[0].mxu0
    %v323 = vadd.f32 %v68, %v322
    %324 = vmatprep.mubr.f32.mxu0 0.0
    %325 = vmatmul.mubr.f32.gmra.mrb[0].mxu0 %v93
    %v326 = vpop.f32.mrb[0].mxu0
    %v327 = vadd.f32 %v64, %v326
    %v328 = vpop.f32.mrb[0].mxu0
    %v329 = vadd.f32 %v68, %v328
    %330 = vmatprep.mubr.f32.mxu0 0.0
    %331 = vmatmul.mubr.f32.gmra.mrb[0].mxu0 %v96
    %v332 = vpop.f32.mrb[0].mxu0
    %v333 = vadd.f32 %v64, %v332
    %v334 = vpop.f32.mrb[0].mxu0
    %v335 = vadd.f32 %v68, %v334
    %336 = vdwg.mxu0
    %v337 = vld [vmem:[#allocation3] sm:$0xff]
    %v338 = vld [vmem:[#allocation3 + $0x8] sm:$0xff]
    %v339 = vld [vmem:[#allocation3 + $0x10] sm:$0xff]
    %v340 = vld [vmem:[#allocation3 + $0x18] sm:$0xff]
    %v341 = vld [vmem:[#allocation3 + $0x20] sm:$0xff]
    %v342 = vld [vmem:[#allocation3 + $0x28] sm:$0xff]
    %v343 = vld [vmem:[#allocation3 + $0x30] sm:$0xff]
    %v344 = vld [vmem:[#allocation3 + $0x38] sm:$0xff]
    %v345 = vld [vmem:[#allocation3 + $0x40] sm:$0xff]
    %v346 = vld [vmem:[#allocation3 + $0x48] sm:$0xff]
    %v347 = vld [vmem:[#allocation3 + $0x50] sm:$0xff]
    %v348 = vld [vmem:[#allocation3 + $0x58] sm:$0xff]
    %v349 = vld [vmem:[#allocation3 + $0x60] sm:$0xff]
    %v350 = vld [vmem:[#allocation3 + $0x68] sm:$0xff]
    %v351 = vld [vmem:[#allocation3 + $0x70] sm:$0xff]
    %v352 = vld [vmem:[#allocation3 + $0x78] sm:$0xff]
    %v353 = vld [vmem:[#allocation3 + $0x80] sm:$0xff]
    %v354 = vld [vmem:[#allocation3 + $0x88] sm:$0xff]
    %v355 = vld [vmem:[#allocation3 + $0x90] sm:$0xff]
    %v356 = vld [vmem:[#allocation3 + $0x98] sm:$0xff]
    %v357 = vld [vmem:[#allocation3 + $0xa0] sm:$0xff]
    %v358 = vld [vmem:[#allocation3 + $0xa8] sm:$0xff]
    %v359 = vld [vmem:[#allocation3 + $0xb0] sm:$0xff]
    %v360 = vld [vmem:[#allocation3 + $0xb8] sm:$0xff]
    %v361 = vld [vmem:[#allocation3 + $0xc0] sm:$0xff]
    %v362 = vld [vmem:[#allocation3 + $0xc8] sm:$0xff]
    %v363 = vld [vmem:[#allocation3 + $0xd0] sm:$0xff]
    %v364 = vld [vmem:[#allocation3 + $0xd8] sm:$0xff]
    %v365 = vld [vmem:[#allocation3 + $0xe0] sm:$0xff]
    %v366 = vld [vmem:[#allocation3 + $0xe8] sm:$0xff]
    %v367 = vld [vmem:[#allocation3 + $0xf0] sm:$0xff]
    %v368 = vld [vmem:[#allocation3 + $0xf8] sm:$0xff]
    %v369 = vld [vmem:[#allocation3 + $0x100] sm:$0xff]
    %v370 = vld [vmem:[#allocation3 + $0x108] sm:$0xff]
    %v371 = vld [vmem:[#allocation3 + $0x110] sm:$0xff]
    %v372 = vld [vmem:[#allocation3 + $0x118] sm:$0xff]
    %v373 = vld [vmem:[#allocation3 + $0x120] sm:$0xff]
    %v374 = vld [vmem:[#allocation3 + $0x128] sm:$0xff]
    %v375 = vld [vmem:[#allocation3 + $0x130] sm:$0xff]
    %v376 = vld [vmem:[#allocation3 + $0x138] sm:$0xff]
    %v377 = vld [vmem:[#allocation3 + $0x140] sm:$0xff]
    %v378 = vld [vmem:[#allocation3 + $0x148] sm:$0xff]
    %v379 = vld [vmem:[#allocation3 + $0x150] sm:$0xff]
    %v380 = vld [vmem:[#allocation3 + $0x158] sm:$0xff]
    %v381 = vld [vmem:[#allocation3 + $0x160] sm:$0xff]
    %v382 = vld [vmem:[#allocation3 + $0x168] sm:$0xff]
    %v383 = vld [vmem:[#allocation3 + $0x170] sm:$0xff]
    %v384 = vld [vmem:[#allocation3 + $0x178] sm:$0xff]
    %v385 = vld [vmem:[#allocation3 + $0x180] sm:$0xff]
    %v386 = vld [vmem:[#allocation3 + $0x188] sm:$0xff]
    %v387 = vld [vmem:[#allocation3 + $0x190] sm:$0xff]
    %v388 = vld [vmem:[#allocation3 + $0x198] sm:$0xff]
    %v389 = vld [vmem:[#allocation3 + $0x1a0] sm:$0xff]
    %v390 = vld [vmem:[#allocation3 + $0x1a8] sm:$0xff]
    %v391 = vld [vmem:[#allocation3 + $0x1b0] sm:$0xff]
    %v392 = vld [vmem:[#allocation3 + $0x1b8] sm:$0xff]
    %v393 = vld [vmem:[#allocation3 + $0x1c0] sm:$0xff]
    %v394 = vld [vmem:[#allocation3 + $0x1c8] sm:$0xff]
    %v395 = vld [vmem:[#allocation3 + $0x1d0] sm:$0xff]
    %v396 = vld [vmem:[#allocation3 + $0x1d8] sm:$0xff]
    %v397 = vld [vmem:[#allocation3 + $0x1e0] sm:$0xff]
    %v398 = vld [vmem:[#allocation3 + $0x1e8] sm:$0xff]
    %v399 = vld [vmem:[#allocation3 + $0x1f0] sm:$0xff]
    %v400 = vld [vmem:[#allocation3 + $0x1f8] sm:$0xff]
    %401 = vmatprep.subr.mxu0 %v338
    %402 = vmatpush1.msra.mxu0 %v337
    %403 = vmatprep.subr.mxu0 %v342
    %404 = vmatpush1.msra.mxu0 %v341
    %405 = vmatprep.subr.mxu0 %v346
    %406 = vmatpush1.msra.mxu0 %v345
    %407 = vmatprep.subr.mxu0 %v350
    %408 = vmatpush1.msra.mxu0 %v349
    %409 = vmatprep.subr.mxu0 %v354
    %410 = vmatpush1.msra.mxu0 %v353
    %411 = vmatprep.subr.mxu0 %v358
    %412 = vmatpush1.msra.mxu0 %v357
    %413 = vmatprep.subr.mxu0 %v362
    %414 = vmatpush1.msra.mxu0 %v361
    %415 = vmatprep.subr.mxu0 %v366
    %416 = vmatpush1.msra.mxu0 %v365
    %417 = vmatprep.subr.mxu0 %v370
    %418 = vmatpush1.msra.mxu0 %v369
    %419 = vmatprep.subr.mxu0 %v374
    %420 = vmatpush1.msra.mxu0 %v373
    %421 = vmatprep.subr.mxu0 %v378
    %422 = vmatpush1.msra.mxu0 %v377
    %423 = vmatprep.subr.mxu0 %v382
    %424 = vmatpush1.msra.mxu0 %v381
    %425 = vmatprep.subr.mxu0 %v386
    %426 = vmatpush1.msra.mxu0 %v385
    %427 = vmatprep.subr.mxu0 %v390
    %428 = vmatpush1.msra.mxu0 %v389
    %429 = vmatprep.subr.mxu0 %v394
    %430 = vmatpush1.msra.mxu0 %v393
    %431 = vmatprep.subr.mxu0 %v398
    %432 = vmatpush1.msra.mxu0 %v397
    %433 = vmatprep.subr.mxu0 0.0
    %434 = vmatpush1.msra.mxu0 0.0
    %435 = vmatprep.subr.mxu0 0.0
    %436 = vmatpush1.msra.mxu0 0.0
    %437 = vmatprep.subr.mxu0 0.0
    %438 = vmatpush1.msra.mxu0 0.0
    %439 = vmatprep.subr.mxu0 0.0
    %440 = vmatpush1.msra.mxu0 0.0
    %441 = vmatprep.subr.mxu0 0.0
    %442 = vmatpush1.msra.mxu0 0.0
    %443 = vmatprep.subr.mxu0 0.0
    %444 = vmatpush1.msra.mxu0 0.0
    %445 = vmatprep.subr.mxu0 0.0
    %446 = vmatpush1.msra.mxu0 0.0
    %447 = vmatprep.subr.mxu0 0.0
    %448 = vmatpush1.msra.mxu0 0.0
    %449 = vmatprep.subr.mxu0 0.0
    %450 = vmatpush1.msra.mxu0 0.0
    %451 = vmatprep.subr.mxu0 0.0
    %452 = vmatpush1.msra.mxu0 0.0
    %453 = vmatprep.subr.mxu0 0.0
    %454 = vmatpush1.msra.mxu0 0.0
    %455 = vmatprep.subr.mxu0 0.0
    %456 = vmatpush1.msra.mxu0 0.0
    %457 = vmatprep.subr.mxu0 0.0
    %458 = vmatpush1.msra.mxu0 0.0
    %459 = vmatprep.subr.mxu0 0.0
    %460 = vmatpush1.msra.mxu0 0.0
    %461 = vmatprep.subr.mxu0 0.0
    %462 = vmatpush1.msra.mxu0 0.0
    %463 = vmatprep.subr.mxu0 0.0
    %464 = vmatpush1.msra.mxu0 0.0
    %465 = vmatprep.mubr.f32.mxu0 0.0
    %466 = vmatmul.mubr.f32.gmra.mrb[0].mxu0 0.0
    %v467 = vpop.f32.mrb[0].mxu0
    %v468 = vadd.f32 0.0, %v467
    %v469 = vpop.f32.mrb[0].mxu0
    %v470 = vadd.f32 0.0, %v469
    %471 = vdwg.mxu0
    %472 = vmatprep.subr.mxu0 %v340
    %473 = vmatpush1.msra.mxu0 %v339
    %474 = vmatprep.subr.mxu0 %v344
    %475 = vmatpush1.msra.mxu0 %v343
    %476 = vmatprep.subr.mxu0 %v348
    %477 = vmatpush1.msra.mxu0 %v347
    %478 = vmatprep.subr.mxu0 %v352
    %479 = vmatpush1.msra.mxu0 %v351
    %480 = vmatprep.subr.mxu0 %v356
    %481 = vmatpush1.msra.mxu0 %v355
    %482 = vmatprep.subr.mxu0 %v360
    %483 = vmatpush1.msra.mxu0 %v359
    %484 = vmatprep.subr.mxu0 %v364
    %485 = vmatpush1.msra.mxu0 %v363
    %486 = vmatprep.subr.mxu0 %v368
    %487 = vmatpush1.msra.mxu0 %v367
    %488 = vmatprep.subr.mxu0 %v372
    %489 = vmatpush1.msra.mxu0 %v371
    %490 = vmatprep.subr.mxu0 %v376
    %491 = vmatpush1.msra.mxu0 %v375
    %492 = vmatprep.subr.mxu0 %v380
    %493 = vmatpush1.msra.mxu0 %v379
    %494 = vmatprep.subr.mxu0 %v384
    %495 = vmatpush1.msra.mxu0 %v383
    %496 = vmatprep.subr.mxu0 %v388
    %497 = vmatpush1.msra.mxu0 %v387
    %498 = vmatprep.subr.mxu0 %v392
    %499 = vmatpush1.msra.mxu0 %v391
    %500 = vmatprep.subr.mxu0 %v396
    %501 = vmatpush1.msra.mxu0 %v395
    %502 = vmatprep.subr.mxu0 %v400
    %503 = vmatpush1.msra.mxu0 %v399
    %504 = vmatprep.subr.mxu0 0.0
    %505 = vmatpush1.msra.mxu0 0.0
    %506 = vmatprep.subr.mxu0 0.0
    %507 = vmatpush1.msra.mxu0 0.0
    %508 = vmatprep.subr.mxu0 0.0
    %509 = vmatpush1.msra.mxu0 0.0
    %510 = vmatprep.subr.mxu0 0.0
    %511 = vmatpush1.msra.mxu0 0.0
    %512 = vmatprep.subr.mxu0 0.0
    %513 = vmatpush1.msra.mxu0 0.0
    %514 = vmatprep.subr.mxu0 0.0
    %515 = vmatpush1.msra.mxu0 0.0
    %516 = vmatprep.subr.mxu0 0.0
    %517 = vmatpush1.msra.mxu0 0.0
    %518 = vmatprep.subr.mxu0 0.0
    %519 = vmatpush1.msra.mxu0 0.0
    %520 = vmatprep.subr.mxu0 0.0
    %521 = vmatpush1.msra.mxu0 0.0
    %522 = vmatprep.subr.mxu0 0.0
    %523 = vmatpush1.msra.mxu0 0.0
    %524 = vmatprep.subr.mxu0 0.0
    %525 = vmatpush1.msra.mxu0 0.0
    %526 = vmatprep.subr.mxu0 0.0
    %527 = vmatpush1.msra.mxu0 0.0
    %528 = vmatprep.subr.mxu0 0.0
    %529 = vmatpush1.msra.mxu0 0.0
    %530 = vmatprep.subr.mxu0 0.0
    %531 = vmatpush1.msra.mxu0 0.0
    %532 = vmatprep.subr.mxu0 0.0
    %533 = vmatpush1.msra.mxu0 0.0
    %534 = vmatprep.subr.mxu0 0.0
    %535 = vmatpush1.msra.mxu0 0.0
    %536 = vmatprep.mubr.f32.mxu0 0.0
    %537 = vmatmul.mubr.f32.gmra.mrb[0].mxu0 0.0
    %v538 = vpop.f32.mrb[0].mxu0
    %v539 = vadd.f32 0.0, %v538
    %v540 = vpop.f32.mrb[0].mxu0
    %v541 = vadd.f32 0.0, %v540
    %542 = vdwg.mxu0
    %v543 = vadd.f32 %v178, %v468
    %v544 = vadd.f32 %v180, %v470
    %v545 = vadd.f32 %v291, %v539
    %v546 = vadd.f32 %v293, %v541
    %v547 = vxor.u32 %v543, 2147483648
    %v548 = vxor.u32 %v544, 2147483648
    %v549 = vxor.u32 %v545, 2147483648
    %v550 = vmul.f32 %v547, 1.442695
    %v551 = vpow.pop %v550
    %v552 = vmul.f32 %v548, 1.442695
    %v553 = vpow.pop %v552
    %v554 = vmul.f32 %v549, 1.442695
    %v555 = vpow.pop %v554
    %v556 = vadd.f32 %v551, 1.0
    %v557 = vadd.f32 %v553, 1.0
    %v558 = vadd.f32 %v555, 1.0
    %v559 = vrcp.pop %v556
    %v560 = vmul.f32 1.0, %v559
    %v561 = vrcp.pop %v557
    %v562 = vmul.f32 1.0, %v561
    %v563 = vrcp.pop %v558
    %v564 = vmul.f32 1.0, %v563
    %v565 = vtanh.pop %v546
    %v566 = vmul.f32 %v562, 0.0
    %v567 = vmul.f32 %v560, %v565
    %v568 = vadd.f32 %v566, %v567
    %v569 = vtanh.pop %v568
    %v570 = vmul.f32 %v564, %v569
    %571 = vmatprep.subr.mxu0 %v338
    %572 = vmatpush1.msra.mxu0 %v337
    %573 = vmatprep.subr.mxu0 %v342
    %574 = vmatpush1.msra.mxu0 %v341
    %575 = vmatprep.subr.mxu0 %v346
    %576 = vmatpush1.msra.mxu0 %v345
    %577 = vmatprep.subr.mxu0 %v350
    %578 = vmatpush1.msra.mxu0 %v349
    %579 = vmatprep.subr.mxu0 %v354
    %580 = vmatpush1.msra.mxu0 %v353
    %581 = vmatprep.subr.mxu0 %v358
    %582 = vmatpush1.msra.mxu0 %v357
    %583 = vmatprep.subr.mxu0 %v362
    %584 = vmatpush1.msra.mxu0 %v361
    %585 = vmatprep.subr.mxu0 %v366
    %586 = vmatpush1.msra.mxu0 %v365
    %587 = vmatprep.subr.mxu0 %v370
    %588 = vmatpush1.msra.mxu0 %v369
    %589 = vmatprep.subr.mxu0 %v374
    %590 = vmatpush1.msra.mxu0 %v373
    %591 = vmatprep.subr.mxu0 %v378
    %592 = vmatpush1.msra.mxu0 %v377
    %593 = vmatprep.subr.mxu0 %v382
    %594 = vmatpush1.msra.mxu0 %v381
    %595 = vmatprep.subr.mxu0 %v386
    %596 = vmatpush1.msra.mxu0 %v385
    %597 = vmatprep.subr.mxu0 %v390
    %598 = vmatpush1.msra.mxu0 %v389
    %599 = vmatprep.subr.mxu0 %v394
    %600 = vmatpush1.msra.mxu0 %v393
    %601 = vmatprep.subr.mxu0 %v398
    %602 = vmatpush1.msra.mxu0 %v397
    %603 = vmatprep.subr.mxu0 0.0
    %604 = vmatpush1.msra.mxu0 0.0
    %605 = vmatprep.subr.mxu0 0.0
    %606 = vmatpush1.msra.mxu0 0.0
    %607 = vmatprep.subr.mxu0 0.0
    %608 = vmatpush1.msra.mxu0 0.0
    %609 = vmatprep.subr.mxu0 0.0
    %610 = vmatpush1.msra.mxu0 0.0
    %611 = vmatprep.subr.mxu0 0.0
    %612 = vmatpush1.msra.mxu0 0.0
    %613 = vmatprep.subr.mxu0 0.0
    %614 = vmatpush1.msra.mxu0 0.0
    %615 = vmatprep.subr.mxu0 0.0
    %616 = vmatpush1.msra.mxu0 0.0
    %617 = vmatprep.subr.mxu0 0.0
    %618 = vmatpush1.msra.mxu0 0.0
    %619 = vmatprep.subr.mxu0 0.0
    %620 = vmatpush1.msra.mxu0 0.0
    %621 = vmatprep.subr.mxu0 0.0
    %622 = vmatpush1.msra.mxu0 0.0
    %623 = vmatprep.subr.mxu0 0.0
    %624 = vmatpush1.msra.mxu0 0.0
    %625 = vmatprep.subr.mxu0 0.0
    %626 = vmatpush1.msra.mxu0 0.0
    %627 = vmatprep.subr.mxu0 0.0
    %628 = vmatpush1.msra.mxu0 0.0
    %629 = vmatprep.subr.mxu0 0.0
    %630 = vmatpush1.msra.mxu0 0.0
    %631 = vmatprep.subr.mxu0 0.0
    %632 = vmatpush1.msra.mxu0 0.0
    %633 = vmatprep.subr.mxu0 0.0
    %634 = vmatpush1.msra.mxu0 0.0
    %635 = vmatprep.mubr.f32.mxu0 0.0
    %636 = vmatmul.mubr.f32.gmra.mrb[0].mxu0 %v570
    %v637 = vpop.f32.mrb[0].mxu0
    %v638 = vadd.f32 0.0, %v637
    %v639 = vpop.f32.mrb[0].mxu0
    %v640 = vadd.f32 0.0, %v639
    %641 = vdwg.mxu0
    %642 = vmatprep.subr.mxu0 %v340
    %643 = vmatpush1.msra.mxu0 %v339
    %644 = vmatprep.subr.mxu0 %v344
    %645 = vmatpush1.msra.mxu0 %v343
    %646 = vmatprep.subr.mxu0 %v348
    %647 = vmatpush1.msra.mxu0 %v347
    %648 = vmatprep.subr.mxu0 %v352
    %649 = vmatpush1.msra.mxu0 %v351
    %650 = vmatprep.subr.mxu0 %v356
    %651 = vmatpush1.msra.mxu0 %v355
    %652 = vmatprep.subr.mxu0 %v360
    %653 = vmatpush1.msra.mxu0 %v359
    %654 = vmatprep.subr.mxu0 %v364
    %655 = vmatpush1.msra.mxu0 %v363
    %656 = vmatprep.subr.mxu0 %v368
    %657 = vmatpush1.msra.mxu0 %v367
    %658 = vmatprep.subr.mxu0 %v372
    %659 = vmatpush1.msra.mxu0 %v371
    %660 = vmatprep.subr.mxu0 %v376
    %661 = vmatpush1.msra.mxu0 %v375
    %662 = vmatprep.subr.mxu0 %v380
    %663 = vmatpush1.msra.mxu0 %v379
    %664 = vmatprep.subr.mxu0 %v384
    %665 = vmatpush1.msra.mxu0 %v383
    %666 = vmatprep.subr.mxu0 %v388
    %667 = vmatpush1.msra.mxu0 %v387
    %668 = vmatprep.subr.mxu0 %v392
    %669 = vmatpush1.msra.mxu0 %v391
    %670 = vmatprep.subr.mxu0 %v396
    %671 = vmatpush1.msra.mxu0 %v395
    %672 = vmatprep.subr.mxu0 %v400
    %673 = vmatpush1.msra.mxu0 %v399
    %674 = vmatprep.subr.mxu0 0.0
    %675 = vmatpush1.msra.mxu0 0.0
    %676 = vmatprep.subr.mxu0 0.0
    %677 = vmatpush1.msra.mxu0 0.0
    %678 = vmatprep.subr.mxu0 0.0
    %679 = vmatpush1.msra.mxu0 0.0
    %680 = vmatprep.subr.mxu0 0.0
    %681 = vmatpush1.msra.mxu0 0.0
    %682 = vmatprep.subr.mxu0 0.0
    %683 = vmatpush1.msra.mxu0 0.0
    %684 = vmatprep.subr.mxu0 0.0
    %685 = vmatpush1.msra.mxu0 0.0
    %686 = vmatprep.subr.mxu0 0.0
    %687 = vmatpush1.msra.mxu0 0.0
    %688 = vmatprep.subr.mxu0 0.0
    %689 = vmatpush1.msra.mxu0 0.0
    %690 = vmatprep.subr.mxu0 0.0
    %691 = vmatpush1.msra.mxu0 0.0
    %692 = vmatprep.subr.mxu0 0.0
    %693 = vmatpush1.msra.mxu0 0.0
    %694 = vmatprep.subr.mxu0 0.0
    %695 = vmatpush1.msra.mxu0 0.0
    %696 = vmatprep.subr.mxu0 0.0
    %697 = vmatpush1.msra.mxu0 0.0
    %698 = vmatprep.subr.mxu0 0.0
    %699 = vmatpush1.msra.mxu0 0.0
    %700 = vmatprep.subr.mxu0 0.0
    %701 = vmatpush1.msra.mxu0 0.0
    %702 = vmatprep.subr.mxu0 0.0
    %703 = vmatpush1.msra.mxu0 0.0
    %704 = vmatprep.subr.mxu0 0.0
    %705 = vmatpush1.msra.mxu0 0.0
    %706 = vmatprep.mubr.f32.mxu0 0.0
    %707 = vmatmul.mubr.f32.gmra.mrb[0].mxu0 %v570
    %v708 = vpop.f32.mrb[0].mxu0
    %v709 = vadd.f32 0.0, %v708
    %v710 = vpop.f32.mrb[0].mxu0
    %v711 = vadd.f32 0.0, %v710
    %712 = vdwg.mxu0
    %v713 = vadd.f32 %v184, %v638
    %v714 = vadd.f32 %v186, %v640
    %v715 = vadd.f32 %v297, %v709
    %v716 = vadd.f32 %v299, %v711
    %v717 = vxor.u32 %v713, 2147483648
    %v718 = vxor.u32 %v714, 2147483648
    %v719 = vxor.u32 %v715, 2147483648
    %v720 = vmul.f32 %v717, 1.442695
    %v721 = vpow.pop %v720
    %v722 = vmul.f32 %v718, 1.442695
    %v723 = vpow.pop %v722
    %v724 = vmul.f32 %v719, 1.442695
    %v725 = vpow.pop %v724
    %v726 = vadd.f32 %v721, 1.0
    %v727 = vadd.f32 %v723, 1.0
    %v728 = vadd.f32 %v725, 1.0
    %v729 = vrcp.pop %v726
    %v730 = vmul.f32 1.0, %v729
    %v731 = vrcp.pop %v727
    %v732 = vmul.f32 1.0, %v731
    %v733 = vrcp.pop %v728
    %v734 = vmul.f32 1.0, %v733
    %v735 = vtanh.pop %v716
    %v736 = vmul.f32 %v732, %v568
    %v737 = vmul.f32 %v730, %v735
    %v738 = vadd.f32 %v736, %v737
    %v739 = vtanh.pop %v738
    %v740 = vmul.f32 %v734, %v739
    %741 = vmatprep.subr.mxu0 %v338
    %742 = vmatpush1.msra.mxu0 %v337
    %743 = vmatprep.subr.mxu0 %v342
    %744 = vmatpush1.msra.mxu0 %v341
    %745 = vmatprep.subr.mxu0 %v346
    %746 = vmatpush1.msra.mxu0 %v345
    %747 = vmatprep.subr.mxu0 %v350
    %748 = vmatpush1.msra.mxu0 %v349
    %749 = vmatprep.subr.mxu0 %v354
    %750 = vmatpush1.msra.mxu0 %v353
    %751 = vmatprep.subr.mxu0 %v358
    %752 = vmatpush1.msra.mxu0 %v357
    %753 = vmatprep.subr.mxu0 %v362
    %754 = vmatpush1.msra.mxu0 %v361
    %755 = vmatprep.subr.mxu0 %v366
    %756 = vmatpush1.msra.mxu0 %v365
    %757 = vmatprep.subr.mxu0 %v370
    %758 = vmatpush1.msra.mxu0 %v369
    %759 = vmatprep.subr.mxu0 %v374
    %760 = vmatpush1.msra.mxu0 %v373
    %761 = vmatprep.subr.mxu0 %v378
    %762 = vmatpush1.msra.mxu0 %v377
    %763 = vmatprep.subr.mxu0 %v382
    %764 = vmatpush1.msra.mxu0 %v381
    %765 = vmatprep.subr.mxu0 %v386
    %766 = vmatpush1.msra.mxu0 %v385
    %767 = vmatprep.subr.mxu0 %v390
    %768 = vmatpush1.msra.mxu0 %v389
    %769 = vmatprep.subr.mxu0 %v394
    %770 = vmatpush1.msra.mxu0 %v393
    %771 = vmatprep.subr.mxu0 %v398
    %772 = vmatpush1.msra.mxu0 %v397
    %773 = vmatprep.subr.mxu0 0.0
    %774 = vmatpush1.msra.mxu0 0.0
    %775 = vmatprep.subr.mxu0 0.0
    %776 = vmatpush1.msra.mxu0 0.0
    %777 = vmatprep.subr.mxu0 0.0
    %778 = vmatpush1.msra.mxu0 0.0
    %779 = vmatprep.subr.mxu0 0.0
    %780 = vmatpush1.msra.mxu0 0.0
    %781 = vmatprep.subr.mxu0 0.0
    %782 = vmatpush1.msra.mxu0 0.0
    %783 = vmatprep.subr.mxu0 0.0
    %784 = vmatpush1.msra.mxu0 0.0
    %785 = vmatprep.subr.mxu0 0.0
    %786 = vmatpush1.msra.mxu0 0.0
    %787 = vmatprep.subr.mxu0 0.0
    %788 = vmatpush1.msra.mxu0 0.0
    %789 = vmatprep.subr.mxu0 0.0
    %790 = vmatpush1.msra.mxu0 0.0
    %791 = vmatprep.subr.mxu0 0.0
    %792 = vmatpush1.msra.mxu0 0.0
    %793 = vmatprep.subr.mxu0 0.0
    %794 = vmatpush1.msra.mxu0 0.0
    %795 = vmatprep.subr.mxu0 0.0
    %796 = vmatpush1.msra.mxu0 0.0
    %797 = vmatprep.subr.mxu0 0.0
    %798 = vmatpush1.msra.mxu0 0.0
    %799 = vmatprep.subr.mxu0 0.0
    %800 = vmatpush1.msra.mxu0 0.0
    %801 = vmatprep.subr.mxu0 0.0
    %802 = vmatpush1.msra.mxu0 0.0
    %803 = vmatprep.subr.mxu0 0.0
    %804 = vmatpush1.msra.mxu0 0.0
    %805 = vmatprep.mubr.f32.mxu0 0.0
    %806 = vmatmul.mubr.f32.gmra.mrb[0].mxu0 %v740
    %v807 = vpop.f32.mrb[0].mxu0
    %v808 = vadd.f32 0.0, %v807
    %v809 = vpop.f32.mrb[0].mxu0
    %v810 = vadd.f32 0.0, %v809
    %811 = vdwg.mxu0
    %812 = vmatprep.subr.mxu0 %v340
    %813 = vmatpush1.msra.mxu0 %v339
    %814 = vmatprep.subr.mxu0 %v344
    %815 = vmatpush1.msra.mxu0 %v343
    %816 = vmatprep.subr.mxu0 %v348
    %817 = vmatpush1.msra.mxu0 %v347
    %818 = vmatprep.subr.mxu0 %v352
    %819 = vmatpush1.msra.mxu0 %v351
    %820 = vmatprep.subr.mxu0 %v356
    %821 = vmatpush1.msra.mxu0 %v355
    %822 = vmatprep.subr.mxu0 %v360
    %823 = vmatpush1.msra.mxu0 %v359
    %824 = vmatprep.subr.mxu0 %v364
    %825 = vmatpush1.msra.mxu0 %v363
    %826 = vmatprep.subr.mxu0 %v368
    %827 = vmatpush1.msra.mxu0 %v367
    %828 = vmatprep.subr.mxu0 %v372
    %829 = vmatpush1.msra.mxu0 %v371
    %830 = vmatprep.subr.mxu0 %v376
    %831 = vmatpush1.msra.mxu0 %v375
    %832 = vmatprep.subr.mxu0 %v380
    %833 = vmatpush1.msra.mxu0 %v379
    %834 = vmatprep.subr.mxu0 %v384
    %835 = vmatpush1.msra.mxu0 %v383
    %836 = vmatprep.subr.mxu0 %v388
    %837 = vmatpush1.msra.mxu0 %v387
    %838 = vmatprep.subr.mxu0 %v392
    %839 = vmatpush1.msra.mxu0 %v391
    %840 = vmatprep.subr.mxu0 %v396
    %841 = vmatpush1.msra.mxu0 %v395
    %842 = vmatprep.subr.mxu0 %v400
    %843 = vmatpush1.msra.mxu0 %v399
    %844 = vmatprep.subr.mxu0 0.0
    %845 = vmatpush1.msra.mxu0 0.0
    %846 = vmatprep.subr.mxu0 0.0
    %847 = vmatpush1.msra.mxu0 0.0
    %848 = vmatprep.subr.mxu0 0.0
    %849 = vmatpush1.msra.mxu0 0.0
    %850 = vmatprep.subr.mxu0 0.0
    %851 = vmatpush1.msra.mxu0 0.0
    %852 = vmatprep.subr.mxu0 0.0
    %853 = vmatpush1.msra.mxu0 0.0
    %854 = vmatprep.subr.mxu0 0.0
    %855 = vmatpush1.msra.mxu0 0.0
    %856 = vmatprep.subr.mxu0 0.0
    %857 = vmatpush1.msra.mxu0 0.0
    %858 = vmatprep.subr.mxu0 0.0
    %859 = vmatpush1.msra.mxu0 0.0
    %860 = vmatprep.subr.mxu0 0.0
    %861 = vmatpush1.msra.mxu0 0.0
    %862 = vmatprep.subr.mxu0 0.0
    %863 = vmatpush1.msra.mxu0 0.0
    %864 = vmatprep.subr.mxu0 0.0
    %865 = vmatpush1.msra.mxu0 0.0
    %866 = vmatprep.subr.mxu0 0.0
    %867 = vmatpush1.msra.mxu0 0.0
    %868 = vmatprep.subr.mxu0 0.0
    %869 = vmatpush1.msra.mxu0 0.0
    %870 = vmatprep.subr.mxu0 0.0
    %871 = vmatpush1.msra.mxu0 0.0
    %872 = vmatprep.subr.mxu0 0.0
    %873 = vmatpush1.msra.mxu0 0.0
    %874 = vmatprep.subr.mxu0 0.0
    %875 = vmatpush1.msra.mxu0 0.0
    %876 = vmatprep.mubr.f32.mxu0 0.0
    %877 = vmatmul.mubr.f32.gmra.mrb[0].mxu0 %v740
    %v878 = vpop.f32.mrb[0].mxu0
    %v879 = vadd.f32 0.0, %v878
    %v880 = vpop.f32.mrb[0].mxu0
    %v881 = vadd.f32 0.0, %v880
    %882 = vdwg.mxu0
    %v883 = vadd.f32 %v190, %v808
    %v884 = vadd.f32 %v192, %v810
    %v885 = vadd.f32 %v303, %v879
    %v886 = vadd.f32 %v305, %v881
    %v887 = vxor.u32 %v883, 2147483648
    %v888 = vxor.u32 %v884, 2147483648
    %v889 = vxor.u32 %v885, 2147483648
    %v890 = vmul.f32 %v887, 1.442695
    %v891 = vpow.pop %v890
    %v892 = vmul.f32 %v888, 1.442695
    %v893 = vpow.pop %v892
    %v894 = vmul.f32 %v889, 1.442695
    %v895 = vpow.pop %v894
    %v896 = vadd.f32 %v891, 1.0
    %v897 = vadd.f32 %v893, 1.0
    %v898 = vadd.f32 %v895, 1.0
    %v899 = vrcp.pop %v896
    %v900 = vmul.f32 1.0, %v899
    %v901 = vrcp.pop %v897
    %v902 = vmul.f32 1.0, %v901
    %v903 = vrcp.pop %v898
    %v904 = vmul.f32 1.0, %v903
    %v905 = vtanh.pop %v886
    %v906 = vmul.f32 %v902, %v738
    %v907 = vmul.f32 %v900, %v905
    %v908 = vadd.f32 %v906, %v907
    %v909 = vtanh.pop %v908
    %v910 = vmul.f32 %v904, %v909
    %911 = vmatprep.subr.mxu0 %v338
    %912 = vmatpush1.msra.mxu0 %v337
    %913 = vmatprep.subr.mxu0 %v342
    %914 = vmatpush1.msra.mxu0 %v341
    %915 = vmatprep.subr.mxu0 %v346
    %916 = vmatpush1.msra.mxu0 %v345
    %917 = vmatprep.subr.mxu0 %v350
    %918 = vmatpush1.msra.mxu0 %v349
    %919 = vmatprep.subr.mxu0 %v354
    %920 = vmatpush1.msra.mxu0 %v353
    %921 = vmatprep.subr.mxu0 %v358
    %922 = vmatpush1.msra.mxu0 %v357
    %923 = vmatprep.subr.mxu0 %v362
    %924 = vmatpush1.msra.mxu0 %v361
    %925 = vmatprep.subr.mxu0 %v366
    %926 = vmatpush1.msra.mxu0 %v365
    %927 = vmatprep.subr.mxu0 %v370
    %928 = vmatpush1.msra.mxu0 %v369
    %929 = vmatprep.subr.mxu0 %v374
    %930 = vmatpush1.msra.mxu0 %v373
    %931 = vmatprep.subr.mxu0 %v378
    %932 = vmatpush1.msra.mxu0 %v377
    %933 = vmatprep.subr.mxu0 %v382
    %934 = vmatpush1.msra.mxu0 %v381
    %935 = vmatprep.subr.mxu0 %v386
    %936 = vmatpush1.msra.mxu0 %v385
    %937 = vmatprep.subr.mxu0 %v390
    %938 = vmatpush1.msra.mxu0 %v389
    %939 = vmatprep.subr.mxu0 %v394
    %940 = vmatpush1.msra.mxu0 %v393
    %941 = vmatprep.subr.mxu0 %v398
    %942 = vmatpush1.msra.mxu0 %v397
    %943 = vmatprep.subr.mxu0 0.0
    %944 = vmatpush1.msra.mxu0 0.0
    %945 = vmatprep.subr.mxu0 0.0
    %946 = vmatpush1.msra.mxu0 0.0
    %947 = vmatprep.subr.mxu0 0.0
    %948 = vmatpush1.msra.mxu0 0.0
    %949 = vmatprep.subr.mxu0 0.0
    %950 = vmatpush1.msra.mxu0 0.0
    %951 = vmatprep.subr.mxu0 0.0
    %952 = vmatpush1.msra.mxu0 0.0
    %953 = vmatprep.subr.mxu0 0.0
    %954 = vmatpush1.msra.mxu0 0.0
    %955 = vmatprep.subr.mxu0 0.0
    %956 = vmatpush1.msra.mxu0 0.0
    %957 = vmatprep.subr.mxu0 0.0
    %958 = vmatpush1.msra.mxu0 0.0
    %959 = vmatprep.subr.mxu0 0.0
    %960 = vmatpush1.msra.mxu0 0.0
    %961 = vmatprep.subr.mxu0 0.0
    %962 = vmatpush1.msra.mxu0 0.0
    %963 = vmatprep.subr.mxu0 0.0
    %964 = vmatpush1.msra.mxu0 0.0
    %965 = vmatprep.subr.mxu0 0.0
    %966 = vmatpush1.msra.mxu0 0.0
    %967 = vmatprep.subr.mxu0 0.0
    %968 = vmatpush1.msra.mxu0 0.0
    %969 = vmatprep.subr.mxu0 0.0
    %970 = vmatpush1.msra.mxu0 0.0
    %971 = vmatprep.subr.mxu0 0.0
    %972 = vmatpush1.msra.mxu0 0.0
    %973 = vmatprep.subr.mxu0 0.0
    %974 = vmatpush1.msra.mxu0 0.0
    %975 = vmatprep.mubr.f32.mxu0 0.0
    %976 = vmatmul.mubr.f32.gmra.mrb[0].mxu0 %v910
    %v977 = vpop.f32.mrb[0].mxu0
    %v978 = vadd.f32 0.0, %v977
    %v979 = vpop.f32.mrb[0].mxu0
    %v980 = vadd.f32 0.0, %v979
    %981 = vdwg.mxu0
    %982 = vmatprep.subr.mxu0 %v340
    %983 = vmatpush1.msra.mxu0 %v339
    %984 = vmatprep.subr.mxu0 %v344
    %985 = vmatpush1.msra.mxu0 %v343
    %986 = vmatprep.subr.mxu0 %v348
    %987 = vmatpush1.msra.mxu0 %v347
    %988 = vmatprep.subr.mxu0 %v352
    %989 = vmatpush1.msra.mxu0 %v351
    %990 = vmatprep.subr.mxu0 %v356
    %991 = vmatpush1.msra.mxu0 %v355
    %992 = vmatprep.subr.mxu0 %v360
    %993 = vmatpush1.msra.mxu0 %v359
    %994 = vmatprep.subr.mxu0 %v364
    %995 = vmatpush1.msra.mxu0 %v363
    %996 = vmatprep.subr.mxu0 %v368
    %997 = vmatpush1.msra.mxu0 %v367
    %998 = vmatprep.subr.mxu0 %v372
    %999 = vmatpush1.msra.mxu0 %v371
    %1000 = vmatprep.subr.mxu0 %v376
    %1001 = vmatpush1.msra.mxu0 %v375
    %1002 = vmatprep.subr.mxu0 %v380
    %1003 = vmatpush1.msra.mxu0 %v379
    %1004 = vmatprep.subr.mxu0 %v384
    %1005 = vmatpush1.msra.mxu0 %v383
    %1006 = vmatprep.subr.mxu0 %v388
    %1007 = vmatpush1.msra.mxu0 %v387
    %1008 = vmatprep.subr.mxu0 %v392
    %1009 = vmatpush1.msra.mxu0 %v391
    %1010 = vmatprep.subr.mxu0 %v396
    %1011 = vmatpush1.msra.mxu0 %v395
    %1012 = vmatprep.subr.mxu0 %v400
    %1013 = vmatpush1.msra.mxu0 %v399
    %1014 = vmatprep.subr.mxu0 0.0
    %1015 = vmatpush1.msra.mxu0 0.0
    %1016 = vmatprep.subr.mxu0 0.0
    %1017 = vmatpush1.msra.mxu0 0.0
    %1018 = vmatprep.subr.mxu0 0.0
    %1019 = vmatpush1.msra.mxu0 0.0
    %1020 = vmatprep.subr.mxu0 0.0
    %1021 = vmatpush1.msra.mxu0 0.0
    %1022 = vmatprep.subr.mxu0 0.0
    %1023 = vmatpush1.msra.mxu0 0.0
    %1024 = vmatprep.subr.mxu0 0.0
    %1025 = vmatpush1.msra.mxu0 0.0
    %1026 = vmatprep.subr.mxu0 0.0
    %1027 = vmatpush1.msra.mxu0 0.0
    %1028 = vmatprep.subr.mxu0 0.0
    %1029 = vmatpush1.msra.mxu0 0.0
    %1030 = vmatprep.subr.mxu0 0.0
    %1031 = vmatpush1.msra.mxu0 0.0
    %1032 = vmatprep.subr.mxu0 0.0
    %1033 = vmatpush1.msra.mxu0 0.0
    %1034 = vmatprep.subr.mxu0 0.0
    %1035 = vmatpush1.msra.mxu0 0.0
    %1036 = vmatprep.subr.mxu0 0.0
    %1037 = vmatpush1.msra.mxu0 0.0
    %1038 = vmatprep.subr.mxu0 0.0
    %1039 = vmatpush1.msra.mxu0 0.0
    %1040 = vmatprep.subr.mxu0 0.0
    %1041 = vmatpush1.msra.mxu0 0.0
    %1042 = vmatprep.subr.mxu0 0.0
    %1043 = vmatpush1.msra.mxu0 0.0
    %1044 = vmatprep.subr.mxu0 0.0
    %1045 = vmatpush1.msra.mxu0 0.0
    %1046 = vmatprep.mubr.f32.mxu0 0.0
    %1047 = vmatmul.mubr.f32.gmra.mrb[0].mxu0 %v910
    %v1048 = vpop.f32.mrb[0].mxu0
    %v1049 = vadd.f32 0.0, %v1048
    %v1050 = vpop.f32.mrb[0].mxu0
    %v1051 = vadd.f32 0.0, %v1050
    %1052 = vdwg.mxu0
    %v1053 = vadd.f32 %v196, %v978
    %v1054 = vadd.f32 %v198, %v980
    %v1055 = vadd.f32 %v309, %v1049
    %v1056 = vadd.f32 %v311, %v1051
    %v1057 = vxor.u32 %v1053, 2147483648
    %v1058 = vxor.u32 %v1054, 2147483648
    %v1059 = vxor.u32 %v1055, 2147483648
    %v1060 = vmul.f32 %v1057, 1.442695
    %v1061 = vpow.pop %v1060
    %v1062 = vmul.f32 %v1058, 1.442695
    %v1063 = vpow.pop %v1062
    %v1064 = vmul.f32 %v1059, 1.442695
    %v1065 = vpow.pop %v1064
    %v1066 = vadd.f32 %v1061, 1.0
    %v1067 = vadd.f32 %v1063, 1.0
    %v1068 = vadd.f32 %v1065, 1.0
    %v1069 = vrcp.pop %v1066
    %v1070 = vmul.f32 1.0, %v1069
    %v1071 = vrcp.pop %v1067
    %v1072 = vmul.f32 1.0, %v1071
    %v1073 = vrcp.pop %v1068
    %v1074 = vmul.f32 1.0, %v1073
    %v1075 = vtanh.pop %v1056
    %v1076 = vmul.f32 %v1072, %v908
    %v1077 = vmul.f32 %v1070, %v1075
    %v1078 = vadd.f32 %v1076, %v1077
    %v1079 = vtanh.pop %v1078
    %v1080 = vmul.f32 %v1074, %v1079
    %1081 = vmatprep.subr.mxu0 %v338
    %1082 = vmatpush1.msra.mxu0 %v337
    %1083 = vmatprep.subr.mxu0 %v342
    %1084 = vmatpush1.msra.mxu0 %v341
    %1085 = vmatprep.subr.mxu0 %v346
    %1086 = vmatpush1.msra.mxu0 %v345
    %1087 = vmatprep.subr.mxu0 %v350
    %1088 = vmatpush1.msra.mxu0 %v349
    %1089 = vmatprep.subr.mxu0 %v354
    %1090 = vmatpush1.msra.mxu0 %v353
    %1091 = vmatprep.subr.mxu0 %v358
    %1092 = vmatpush1.msra.mxu0 %v357
    %1093 = vmatprep.subr.mxu0 %v362
    %1094 = vmatpush1.msra.mxu0 %v361
    %1095 = vmatprep.subr.mxu0 %v366
    %1096 = vmatpush1.msra.mxu0 %v365
    %1097 = vmatprep.subr.mxu0 %v370
    %1098 = vmatpush1.msra.mxu0 %v369
    %1099 = vmatprep.subr.mxu0 %v374
    %1100 = vmatpush1.msra.mxu0 %v373
    %1101 = vmatprep.subr.mxu0 %v378
    %1102 = vmatpush1.msra.mxu0 %v377
    %1103 = vmatprep.subr.mxu0 %v382
    %1104 = vmatpush1.msra.mxu0 %v381
    %1105 = vmatprep.subr.mxu0 %v386
    %1106 = vmatpush1.msra.mxu0 %v385
    %1107 = vmatprep.subr.mxu0 %v390
    %1108 = vmatpush1.msra.mxu0 %v389
    %1109 = vmatprep.subr.mxu0 %v394
    %1110 = vmatpush1.msra.mxu0 %v393
    %1111 = vmatprep.subr.mxu0 %v398
    %1112 = vmatpush1.msra.mxu0 %v397
    %1113 = vmatprep.subr.mxu0 0.0
    %1114 = vmatpush1.msra.mxu0 0.0
    %1115 = vmatprep.subr.mxu0 0.0
    %1116 = vmatpush1.msra.mxu0 0.0
    %1117 = vmatprep.subr.mxu0 0.0
    %1118 = vmatpush1.msra.mxu0 0.0
    %1119 = vmatprep.subr.mxu0 0.0
    %1120 = vmatpush1.msra.mxu0 0.0
    %1121 = vmatprep.subr.mxu0 0.0
    %1122 = vmatpush1.msra.mxu0 0.0
    %1123 = vmatprep.subr.mxu0 0.0
    %1124 = vmatpush1.msra.mxu0 0.0
    %1125 = vmatprep.subr.mxu0 0.0
    %1126 = vmatpush1.msra.mxu0 0.0
    %1127 = vmatprep.subr.mxu0 0.0
    %1128 = vmatpush1.msra.mxu0 0.0
    %1129 = vmatprep.subr.mxu0 0.0
    %1130 = vmatpush1.msra.mxu0 0.0
    %1131 = vmatprep.subr.mxu0 0.0
    %1132 = vmatpush1.msra.mxu0 0.0
    %1133 = vmatprep.subr.mxu0 0.0
    %1134 = vmatpush1.msra.mxu0 0.0
    %1135 = vmatprep.subr.mxu0 0.0
    %1136 = vmatpush1.msra.mxu0 0.0
    %1137 = vmatprep.subr.mxu0 0.0
    %1138 = vmatpush1.msra.mxu0 0.0
    %1139 = vmatprep.subr.mxu0 0.0
    %1140 = vmatpush1.msra.mxu0 0.0
    %1141 = vmatprep.subr.mxu0 0.0
    %1142 = vmatpush1.msra.mxu0 0.0
    %1143 = vmatprep.subr.mxu0 0.0
    %1144 = vmatpush1.msra.mxu0 0.0
    %1145 = vmatprep.mubr.f32.mxu0 0.0
    %1146 = vmatmul.mubr.f32.gmra.mrb[0].mxu0 %v1080
    %v1147 = vpop.f32.mrb[0].mxu0
    %v1148 = vadd.f32 0.0, %v1147
    %v1149 = vpop.f32.mrb[0].mxu0
    %v1150 = vadd.f32 0.0, %v1149
    %1151 = vdwg.mxu0
    %1152 = vmatprep.subr.mxu0 %v340
    %1153 = vmatpush1.msra.mxu0 %v339
    %1154 = vmatprep.subr.mxu0 %v344
    %1155 = vmatpush1.msra.mxu0 %v343
    %1156 = vmatprep.subr.mxu0 %v348
    %1157 = vmatpush1.msra.mxu0 %v347
    %1158 = vmatprep.subr.mxu0 %v352
    %1159 = vmatpush1.msra.mxu0 %v351
    %1160 = vmatprep.subr.mxu0 %v356
    %1161 = vmatpush1.msra.mxu0 %v355
    %1162 = vmatprep.subr.mxu0 %v360
    %1163 = vmatpush1.msra.mxu0 %v359
    %1164 = vmatprep.subr.mxu0 %v364
    %1165 = vmatpush1.msra.mxu0 %v363
    %1166 = vmatprep.subr.mxu0 %v368
    %1167 = vmatpush1.msra.mxu0 %v367
    %1168 = vmatprep.subr.mxu0 %v372
    %1169 = vmatpush1.msra.mxu0 %v371
    %1170 = vmatprep.subr.mxu0 %v376
    %1171 = vmatpush1.msra.mxu0 %v375
    %1172 = vmatprep.subr.mxu0 %v380
    %1173 = vmatpush1.msra.mxu0 %v379
    %1174 = vmatprep.subr.mxu0 %v384
    %1175 = vmatpush1.msra.mxu0 %v383
    %1176 = vmatprep.subr.mxu0 %v388
    %1177 = vmatpush1.msra.mxu0 %v387
    %1178 = vmatprep.subr.mxu0 %v392
    %1179 = vmatpush1.msra.mxu0 %v391
    %1180 = vmatprep.subr.mxu0 %v396
    %1181 = vmatpush1.msra.mxu0 %v395
    %1182 = vmatprep.subr.mxu0 %v400
    %1183 = vmatpush1.msra.mxu0 %v399
    %1184 = vmatprep.subr.mxu0 0.0
    %1185 = vmatpush1.msra.mxu0 0.0
    %1186 = vmatprep.subr.mxu0 0.0
    %1187 = vmatpush1.msra.mxu0 0.0
    %1188 = vmatprep.subr.mxu0 0.0
    %1189 = vmatpush1.msra.mxu0 0.0
    %1190 = vmatprep.subr.mxu0 0.0
    %1191 = vmatpush1.msra.mxu0 0.0
    %1192 = vmatprep.subr.mxu0 0.0
    %1193 = vmatpush1.msra.mxu0 0.0
    %1194 = vmatprep.subr.mxu0 0.0
    %1195 = vmatpush1.msra.mxu0 0.0
    %1196 = vmatprep.subr.mxu0 0.0
    %1197 = vmatpush1.msra.mxu0 0.0
    %1198 = vmatprep.subr.mxu0 0.0
    %1199 = vmatpush1.msra.mxu0 0.0
    %1200 = vmatprep.subr.mxu0 0.0
    %1201 = vmatpush1.msra.mxu0 0.0
    %1202 = vmatprep.subr.mxu0 0.0
    %1203 = vmatpush1.msra.mxu0 0.0
    %1204 = vmatprep.subr.mxu0 0.0
    %1205 = vmatpush1.msra.mxu0 0.0
    %1206 = vmatprep.subr.mxu0 0.0
    %1207 = vmatpush1.msra.mxu0 0.0
    %1208 = vmatprep.subr.mxu0 0.0
    %1209 = vmatpush1.msra.mxu0 0.0
    %1210 = vmatprep.subr.mxu0 0.0
    %1211 = vmatpush1.msra.mxu0 0.0
    %1212 = vmatprep.subr.mxu0 0.0
    %1213 = vmatpush1.msra.mxu0 0.0
    %1214 = vmatprep.subr.mxu0 0.0
    %1215 = vmatpush1.msra.mxu0 0.0
    %1216 = vmatprep.mubr.f32.mxu0 0.0
    %1217 = vmatmul.mubr.f32.gmra.mrb[0].mxu0 %v1080
    %v1218 = vpop.f32.mrb[0].mxu0
    %v1219 = vadd.f32 0.0, %v1218
    %v1220 = vpop.f32.mrb[0].mxu0
    %v1221 = vadd.f32 0.0, %v1220
    %1222 = vdwg.mxu0
    %v1223 = vadd.f32 %v202, %v1148
    %v1224 = vadd.f32 %v204, %v1150
    %v1225 = vadd.f32 %v315, %v1219
    %v1226 = vadd.f32 %v317, %v1221
    %v1227 = vxor.u32 %v1223, 2147483648
    %v1228 = vxor.u32 %v1224, 2147483648
    %v1229 = vxor.u32 %v1225, 2147483648
    %v1230 = vmul.f32 %v1227, 1.442695
    %v1231 = vpow.pop %v1230
    %v1232 = vmul.f32 %v1228, 1.442695
    %v1233 = vpow.pop %v1232
    %v1234 = vmul.f32 %v1229, 1.442695
    %v1235 = vpow.pop %v1234
    %v1236 = vadd.f32 %v1231, 1.0
    %v1237 = vadd.f32 %v1233, 1.0
    %v1238 = vadd.f32 %v1235, 1.0
    %v1239 = vrcp.pop %v1236
    %v1240 = vmul.f32 1.0, %v1239
    %v1241 = vrcp.pop %v1237
    %v1242 = vmul.f32 1.0, %v1241
    %v1243 = vrcp.pop %v1238
    %v1244 = vmul.f32 1.0, %v1243
    %v1245 = vtanh.pop %v1226
    %v1246 = vmul.f32 %v1242, %v1078
    %v1247 = vmul.f32 %v1240, %v1245
    %v1248 = vadd.f32 %v1246, %v1247
    %v1249 = vtanh.pop %v1248
    %v1250 = vmul.f32 %v1244, %v1249
    %1251 = vmatprep.subr.mxu0 %v338
    %1252 = vmatpush1.msra.mxu0 %v337
    %1253 = vmatprep.subr.mxu0 %v342
    %1254 = vmatpush1.msra.mxu0 %v341
    %1255 = vmatprep.subr.mxu0 %v346
    %1256 = vmatpush1.msra.mxu0 %v345
    %1257 = vmatprep.subr.mxu0 %v350
    %1258 = vmatpush1.msra.mxu0 %v349
    %1259 = vmatprep.subr.mxu0 %v354
    %1260 = vmatpush1.msra.mxu0 %v353
    %1261 = vmatprep.subr.mxu0 %v358
    %1262 = vmatpush1.msra.mxu0 %v357
    %1263 = vmatprep.subr.mxu0 %v362
    %1264 = vmatpush1.msra.mxu0 %v361
    %1265 = vmatprep.subr.mxu0 %v366
    %1266 = vmatpush1.msra.mxu0 %v365
    %1267 = vmatprep.subr.mxu0 %v370
    %1268 = vmatpush1.msra.mxu0 %v369
    %1269 = vmatprep.subr.mxu0 %v374
    %1270 = vmatpush1.msra.mxu0 %v373
    %1271 = vmatprep.subr.mxu0 %v378
    %1272 = vmatpush1.msra.mxu0 %v377
    %1273 = vmatprep.subr.mxu0 %v382
    %1274 = vmatpush1.msra.mxu0 %v381
    %1275 = vmatprep.subr.mxu0 %v386
    %1276 = vmatpush1.msra.mxu0 %v385
    %1277 = vmatprep.subr.mxu0 %v390
    %1278 = vmatpush1.msra.mxu0 %v389
    %1279 = vmatprep.subr.mxu0 %v394
    %1280 = vmatpush1.msra.mxu0 %v393
    %1281 = vmatprep.subr.mxu0 %v398
    %1282 = vmatpush1.msra.mxu0 %v397
    %1283 = vmatprep.subr.mxu0 0.0
    %1284 = vmatpush1.msra.mxu0 0.0
    %1285 = vmatprep.subr.mxu0 0.0
    %1286 = vmatpush1.msra.mxu0 0.0
    %1287 = vmatprep.subr.mxu0 0.0
    %1288 = vmatpush1.msra.mxu0 0.0
    %1289 = vmatprep.subr.mxu0 0.0
    %1290 = vmatpush1.msra.mxu0 0.0
    %1291 = vmatprep.subr.mxu0 0.0
    %1292 = vmatpush1.msra.mxu0 0.0
    %1293 = vmatprep.subr.mxu0 0.0
    %1294 = vmatpush1.msra.mxu0 0.0
    %1295 = vmatprep.subr.mxu0 0.0
    %1296 = vmatpush1.msra.mxu0 0.0
    %1297 = vmatprep.subr.mxu0 0.0
    %1298 = vmatpush1.msra.mxu0 0.0
    %1299 = vmatprep.subr.mxu0 0.0
    %1300 = vmatpush1.msra.mxu0 0.0
    %1301 = vmatprep.subr.mxu0 0.0
    %1302 = vmatpush1.msra.mxu0 0.0
    %1303 = vmatprep.subr.mxu0 0.0
    %1304 = vmatpush1.msra.mxu0 0.0
    %1305 = vmatprep.subr.mxu0 0.0
    %1306 = vmatpush1.msra.mxu0 0.0
    %1307 = vmatprep.subr.mxu0 0.0
    %1308 = vmatpush1.msra.mxu0 0.0
    %1309 = vmatprep.subr.mxu0 0.0
    %1310 = vmatpush1.msra.mxu0 0.0
    %1311 = vmatprep.subr.mxu0 0.0
    %1312 = vmatpush1.msra.mxu0 0.0
    %1313 = vmatprep.subr.mxu0 0.0
    %1314 = vmatpush1.msra.mxu0 0.0
    %1315 = vmatprep.mubr.f32.mxu0 0.0
    %1316 = vmatmul.mubr.f32.gmra.mrb[0].mxu0 %v1250
    %v1317 = vpop.f32.mrb[0].mxu0
    %v1318 = vadd.f32 0.0, %v1317
    %v1319 = vpop.f32.mrb[0].mxu0
    %v1320 = vadd.f32 0.0, %v1319
    %1321 = vdwg.mxu0
    %1322 = vmatprep.subr.mxu0 %v340
    %1323 = vmatpush1.msra.mxu0 %v339
    %1324 = vmatprep.subr.mxu0 %v344
    %1325 = vmatpush1.msra.mxu0 %v343
    %1326 = vmatprep.subr.mxu0 %v348
    %1327 = vmatpush1.msra.mxu0 %v347
    %1328 = vmatprep.subr.mxu0 %v352
    %1329 = vmatpush1.msra.mxu0 %v351
    %1330 = vmatprep.subr.mxu0 %v356
    %1331 = vmatpush1.msra.mxu0 %v355
    %1332 = vmatprep.subr.mxu0 %v360
    %1333 = vmatpush1.msra.mxu0 %v359
    %1334 = vmatprep.subr.mxu0 %v364
    %1335 = vmatpush1.msra.mxu0 %v363
    %1336 = vmatprep.subr.mxu0 %v368
    %1337 = vmatpush1.msra.mxu0 %v367
    %1338 = vmatprep.subr.mxu0 %v372
    %1339 = vmatpush1.msra.mxu0 %v371
    %1340 = vmatprep.subr.mxu0 %v376
    %1341 = vmatpush1.msra.mxu0 %v375
    %1342 = vmatprep.subr.mxu0 %v380
    %1343 = vmatpush1.msra.mxu0 %v379
    %1344 = vmatprep.subr.mxu0 %v384
    %1345 = vmatpush1.msra.mxu0 %v383
    %1346 = vmatprep.subr.mxu0 %v388
    %1347 = vmatpush1.msra.mxu0 %v387
    %1348 = vmatprep.subr.mxu0 %v392
    %1349 = vmatpush1.msra.mxu0 %v391
    %1350 = vmatprep.subr.mxu0 %v396
    %1351 = vmatpush1.msra.mxu0 %v395
    %1352 = vmatprep.subr.mxu0 %v400
    %1353 = vmatpush1.msra.mxu0 %v399
    %1354 = vmatprep.subr.mxu0 0.0
    %1355 = vmatpush1.msra.mxu0 0.0
    %1356 = vmatprep.subr.mxu0 0.0
    %1357 = vmatpush1.msra.mxu0 0.0
    %1358 = vmatprep.subr.mxu0 0.0
    %1359 = vmatpush1.msra.mxu0 0.0
    %1360 = vmatprep.subr.mxu0 0.0
    %1361 = vmatpush1.msra.mxu0 0.0
    %1362 = vmatprep.subr.mxu0 0.0
    %1363 = vmatpush1.msra.mxu0 0.0
    %1364 = vmatprep.subr.mxu0 0.0
    %1365 = vmatpush1.msra.mxu0 0.0
    %1366 = vmatprep.subr.mxu0 0.0
    %1367 = vmatpush1.msra.mxu0 0.0
    %1368 = vmatprep.subr.mxu0 0.0
    %1369 = vmatpush1.msra.mxu0 0.0
    %1370 = vmatprep.subr.mxu0 0.0
    %1371 = vmatpush1.msra.mxu0 0.0
    %1372 = vmatprep.subr.mxu0 0.0
    %1373 = vmatpush1.msra.mxu0 0.0
    %1374 = vmatprep.subr.mxu0 0.0
    %1375 = vmatpush1.msra.mxu0 0.0
    %1376 = vmatprep.subr.mxu0 0.0
    %1377 = vmatpush1.msra.mxu0 0.0
    %1378 = vmatprep.subr.mxu0 0.0
    %1379 = vmatpush1.msra.mxu0 0.0
    %1380 = vmatprep.subr.mxu0 0.0
    %1381 = vmatpush1.msra.mxu0 0.0
    %1382 = vmatprep.subr.mxu0 0.0
    %1383 = vmatpush1.msra.mxu0 0.0
    %1384 = vmatprep.subr.mxu0 0.0
    %1385 = vmatpush1.msra.mxu0 0.0
    %1386 = vmatprep.mubr.f32.mxu0 0.0
    %1387 = vmatmul.mubr.f32.gmra.mrb[0].mxu0 %v1250
    %v1388 = vpop.f32.mrb[0].mxu0
    %v1389 = vadd.f32 0.0, %v1388
    %v1390 = vpop.f32.mrb[0].mxu0
    %v1391 = vadd.f32 0.0, %v1390
    %1392 = vdwg.mxu0
    %v1393 = vadd.f32 %v208, %v1318
    %v1394 = vadd.f32 %v210, %v1320
    %v1395 = vadd.f32 %v321, %v1389
    %v1396 = vadd.f32 %v323, %v1391
    %v1397 = vxor.u32 %v1393, 2147483648
    %v1398 = vxor.u32 %v1394, 2147483648
    %v1399 = vxor.u32 %v1395, 2147483648
    %v1400 = vmul.f32 %v1397, 1.442695
    %v1401 = vpow.pop %v1400
    %v1402 = vmul.f32 %v1398, 1.442695
    %v1403 = vpow.pop %v1402
    %v1404 = vmul.f32 %v1399, 1.442695
    %v1405 = vpow.pop %v1404
    %v1406 = vadd.f32 %v1401, 1.0
    %v1407 = vadd.f32 %v1403, 1.0
    %v1408 = vadd.f32 %v1405, 1.0
    %v1409 = vrcp.pop %v1406
    %v1410 = vmul.f32 1.0, %v1409
    %v1411 = vrcp.pop %v1407
    %v1412 = vmul.f32 1.0, %v1411
    %v1413 = vrcp.pop %v1408
    %v1414 = vmul.f32 1.0, %v1413
    %v1415 = vtanh.pop %v1396
    %v1416 = vmul.f32 %v1412, %v1248
    %v1417 = vmul.f32 %v1410, %v1415
    %v1418 = vadd.f32 %v1416, %v1417
    %v1419 = vtanh.pop %v1418
    %v1420 = vmul.f32 %v1414, %v1419
    %1421 = vmatprep.subr.mxu0 %v338
    %1422 = vmatpush1.msra.mxu0 %v337
    %1423 = vmatprep.subr.mxu0 %v342
    %1424 = vmatpush1.msra.mxu0 %v341
    %1425 = vmatprep.subr.mxu0 %v346
    %1426 = vmatpush1.msra.mxu0 %v345
    %1427 = vmatprep.subr.mxu0 %v350
    %1428 = vmatpush1.msra.mxu0 %v349
    %1429 = vmatprep.subr.mxu0 %v354
    %1430 = vmatpush1.msra.mxu0 %v353
    %1431 = vmatprep.subr.mxu0 %v358
    %1432 = vmatpush1.msra.mxu0 %v357
    %1433 = vmatprep.subr.mxu0 %v362
    %1434 = vmatpush1.msra.mxu0 %v361
    %1435 = vmatprep.subr.mxu0 %v366
    %1436 = vmatpush1.msra.mxu0 %v365
    %1437 = vmatprep.subr.mxu0 %v370
    %1438 = vmatpush1.msra.mxu0 %v369
    %1439 = vmatprep.subr.mxu0 %v374
    %1440 = vmatpush1.msra.mxu0 %v373
    %1441 = vmatprep.subr.mxu0 %v378
    %1442 = vmatpush1.msra.mxu0 %v377
    %1443 = vmatprep.subr.mxu0 %v382
    %1444 = vmatpush1.msra.mxu0 %v381
    %1445 = vmatprep.subr.mxu0 %v386
    %1446 = vmatpush1.msra.mxu0 %v385
    %1447 = vmatprep.subr.mxu0 %v390
    %1448 = vmatpush1.msra.mxu0 %v389
    %1449 = vmatprep.subr.mxu0 %v394
    %1450 = vmatpush1.msra.mxu0 %v393
    %1451 = vmatprep.subr.mxu0 %v398
    %1452 = vmatpush1.msra.mxu0 %v397
    %1453 = vmatprep.subr.mxu0 0.0
    %1454 = vmatpush1.msra.mxu0 0.0
    %1455 = vmatprep.subr.mxu0 0.0
    %1456 = vmatpush1.msra.mxu0 0.0
    %1457 = vmatprep.subr.mxu0 0.0
    %1458 = vmatpush1.msra.mxu0 0.0
    %1459 = vmatprep.subr.mxu0 0.0
    %1460 = vmatpush1.msra.mxu0 0.0
    %1461 = vmatprep.subr.mxu0 0.0
    %1462 = vmatpush1.msra.mxu0 0.0
    %1463 = vmatprep.subr.mxu0 0.0
    %1464 = vmatpush1.msra.mxu0 0.0
    %1465 = vmatprep.subr.mxu0 0.0
    %1466 = vmatpush1.msra.mxu0 0.0
    %1467 = vmatprep.subr.mxu0 0.0
    %1468 = vmatpush1.msra.mxu0 0.0
    %1469 = vmatprep.subr.mxu0 0.0
    %1470 = vmatpush1.msra.mxu0 0.0
    %1471 = vmatprep.subr.mxu0 0.0
    %1472 = vmatpush1.msra.mxu0 0.0
    %1473 = vmatprep.subr.mxu0 0.0
    %1474 = vmatpush1.msra.mxu0 0.0
    %1475 = vmatprep.subr.mxu0 0.0
    %1476 = vmatpush1.msra.mxu0 0.0
    %1477 = vmatprep.subr.mxu0 0.0
    %1478 = vmatpush1.msra.mxu0 0.0
    %1479 = vmatprep.subr.mxu0 0.0
    %1480 = vmatpush1.msra.mxu0 0.0
    %1481 = vmatprep.subr.mxu0 0.0
    %1482 = vmatpush1.msra.mxu0 0.0
    %1483 = vmatprep.subr.mxu0 0.0
    %1484 = vmatpush1.msra.mxu0 0.0
    %1485 = vmatprep.mubr.f32.mxu0 0.0
    %1486 = vmatmul.mubr.f32.gmra.mrb[0].mxu0 %v1420
    %v1487 = vpop.f32.mrb[0].mxu0
    %v1488 = vadd.f32 0.0, %v1487
    %v1489 = vpop.f32.mrb[0].mxu0
    %v1490 = vadd.f32 0.0, %v1489
    %1491 = vdwg.mxu0
    %1492 = vmatprep.subr.mxu0 %v340
    %1493 = vmatpush1.msra.mxu0 %v339
    %1494 = vmatprep.subr.mxu0 %v344
    %1495 = vmatpush1.msra.mxu0 %v343
    %1496 = vmatprep.subr.mxu0 %v348
    %1497 = vmatpush1.msra.mxu0 %v347
    %1498 = vmatprep.subr.mxu0 %v352
    %1499 = vmatpush1.msra.mxu0 %v351
    %1500 = vmatprep.subr.mxu0 %v356
    %1501 = vmatpush1.msra.mxu0 %v355
    %1502 = vmatprep.subr.mxu0 %v360
    %1503 = vmatpush1.msra.mxu0 %v359
    %1504 = vmatprep.subr.mxu0 %v364
    %1505 = vmatpush1.msra.mxu0 %v363
    %1506 = vmatprep.subr.mxu0 %v368
    %1507 = vmatpush1.msra.mxu0 %v367
    %1508 = vmatprep.subr.mxu0 %v372
    %1509 = vmatpush1.msra.mxu0 %v371
    %1510 = vmatprep.subr.mxu0 %v376
    %1511 = vmatpush1.msra.mxu0 %v375
    %1512 = vmatprep.subr.mxu0 %v380
    %1513 = vmatpush1.msra.mxu0 %v379
    %1514 = vmatprep.subr.mxu0 %v384
    %1515 = vmatpush1.msra.mxu0 %v383
    %1516 = vmatprep.subr.mxu0 %v388
    %1517 = vmatpush1.msra.mxu0 %v387
    %1518 = vmatprep.subr.mxu0 %v392
    %1519 = vmatpush1.msra.mxu0 %v391
    %1520 = vmatprep.subr.mxu0 %v396
    %1521 = vmatpush1.msra.mxu0 %v395
    %1522 = vmatprep.subr.mxu0 %v400
    %1523 = vmatpush1.msra.mxu0 %v399
    %1524 = vmatprep.subr.mxu0 0.0
    %1525 = vmatpush1.msra.mxu0 0.0
    %1526 = vmatprep.subr.mxu0 0.0
    %1527 = vmatpush1.msra.mxu0 0.0
    %1528 = vmatprep.subr.mxu0 0.0
    %1529 = vmatpush1.msra.mxu0 0.0
    %1530 = vmatprep.subr.mxu0 0.0
    %1531 = vmatpush1.msra.mxu0 0.0
    %1532 = vmatprep.subr.mxu0 0.0
    %1533 = vmatpush1.msra.mxu0 0.0
    %1534 = vmatprep.subr.mxu0 0.0
    %1535 = vmatpush1.msra.mxu0 0.0
    %1536 = vmatprep.subr.mxu0 0.0
    %1537 = vmatpush1.msra.mxu0 0.0
    %1538 = vmatprep.subr.mxu0 0.0
    %1539 = vmatpush1.msra.mxu0 0.0
    %1540 = vmatprep.subr.mxu0 0.0
    %1541 = vmatpush1.msra.mxu0 0.0
    %1542 = vmatprep.subr.mxu0 0.0
    %1543 = vmatpush1.msra.mxu0 0.0
    %1544 = vmatprep.subr.mxu0 0.0
    %1545 = vmatpush1.msra.mxu0 0.0
    %1546 = vmatprep.subr.mxu0 0.0
    %1547 = vmatpush1.msra.mxu0 0.0
    %1548 = vmatprep.subr.mxu0 0.0
    %1549 = vmatpush1.msra.mxu0 0.0
    %1550 = vmatprep.subr.mxu0 0.0
    %1551 = vmatpush1.msra.mxu0 0.0
    %1552 = vmatprep.subr.mxu0 0.0
    %1553 = vmatpush1.msra.mxu0 0.0
    %1554 = vmatprep.subr.mxu0 0.0
    %1555 = vmatpush1.msra.mxu0 0.0
    %1556 = vmatprep.mubr.f32.mxu0 0.0
    %1557 = vmatmul.mubr.f32.gmra.mrb[0].mxu0 %v1420
    %v1558 = vpop.f32.mrb[0].mxu0
    %v1559 = vadd.f32 0.0, %v1558
    %v1560 = vpop.f32.mrb[0].mxu0
    %v1561 = vadd.f32 0.0, %v1560
    %1562 = vdwg.mxu0
    %v1563 = vadd.f32 %v214, %v1488
    %v1564 = vadd.f32 %v216, %v1490
    %v1565 = vadd.f32 %v327, %v1559
    %v1566 = vadd.f32 %v329, %v1561
    %v1567 = vxor.u32 %v1563, 2147483648
    %v1568 = vxor.u32 %v1564, 2147483648
    %v1569 = vxor.u32 %v1565, 2147483648
    %v1570 = vmul.f32 %v1567, 1.442695
    %v1571 = vpow.pop %v1570
    %v1572 = vmul.f32 %v1568, 1.442695
    %v1573 = vpow.pop %v1572
    %v1574 = vmul.f32 %v1569, 1.442695
    %v1575 = vpow.pop %v1574
    %v1576 = vadd.f32 %v1571, 1.0
    %v1577 = vadd.f32 %v1573, 1.0
    %v1578 = vadd.f32 %v1575, 1.0
    %v1579 = vrcp.pop %v1576
    %v1580 = vmul.f32 1.0, %v1579
    %v1581 = vrcp.pop %v1577
    %v1582 = vmul.f32 1.0, %v1581
    %v1583 = vrcp.pop %v1578
    %v1584 = vmul.f32 1.0, %v1583
    %v1585 = vtanh.pop %v1566
    %v1586 = vmul.f32 %v1582, %v1418
    %v1587 = vmul.f32 %v1580, %v1585
    %v1588 = vadd.f32 %v1586, %v1587
    %v1589 = vtanh.pop %v1588
    %v1590 = vmul.f32 %v1584, %v1589
    %1591 = vmatprep.subr.mxu0 %v338
    %1592 = vmatpush1.msra.mxu0 %v337
    %1593 = vmatprep.subr.mxu0 %v342
    %1594 = vmatpush1.msra.mxu0 %v341
    %1595 = vmatprep.subr.mxu0 %v346
    %1596 = vmatpush1.msra.mxu0 %v345
    %1597 = vmatprep.subr.mxu0 %v350
    %1598 = vmatpush1.msra.mxu0 %v349
    %1599 = vmatprep.subr.mxu0 %v354
    %1600 = vmatpush1.msra.mxu0 %v353
    %1601 = vmatprep.subr.mxu0 %v358
    %1602 = vmatpush1.msra.mxu0 %v357
    %1603 = vmatprep.subr.mxu0 %v362
    %1604 = vmatpush1.msra.mxu0 %v361
    %1605 = vmatprep.subr.mxu0 %v366
    %1606 = vmatpush1.msra.mxu0 %v365
    %1607 = vmatprep.subr.mxu0 %v370
    %1608 = vmatpush1.msra.mxu0 %v369
    %1609 = vmatprep.subr.mxu0 %v374
    %1610 = vmatpush1.msra.mxu0 %v373
    %1611 = vmatprep.subr.mxu0 %v378
    %1612 = vmatpush1.msra.mxu0 %v377
    %1613 = vmatprep.subr.mxu0 %v382
    %1614 = vmatpush1.msra.mxu0 %v381
    %1615 = vmatprep.subr.mxu0 %v386
    %1616 = vmatpush1.msra.mxu0 %v385
    %1617 = vmatprep.subr.mxu0 %v390
    %1618 = vmatpush1.msra.mxu0 %v389
    %1619 = vmatprep.subr.mxu0 %v394
    %1620 = vmatpush1.msra.mxu0 %v393
    %1621 = vmatprep.subr.mxu0 %v398
    %1622 = vmatpush1.msra.mxu0 %v397
    %1623 = vmatprep.subr.mxu0 0.0
    %1624 = vmatpush1.msra.mxu0 0.0
    %1625 = vmatprep.subr.mxu0 0.0
    %1626 = vmatpush1.msra.mxu0 0.0
    %1627 = vmatprep.subr.mxu0 0.0
    %1628 = vmatpush1.msra.mxu0 0.0
    %1629 = vmatprep.subr.mxu0 0.0
    %1630 = vmatpush1.msra.mxu0 0.0
    %1631 = vmatprep.subr.mxu0 0.0
    %1632 = vmatpush1.msra.mxu0 0.0
    %1633 = vmatprep.subr.mxu0 0.0
    %1634 = vmatpush1.msra.mxu0 0.0
    %1635 = vmatprep.subr.mxu0 0.0
    %1636 = vmatpush1.msra.mxu0 0.0
    %1637 = vmatprep.subr.mxu0 0.0
    %1638 = vmatpush1.msra.mxu0 0.0
    %1639 = vmatprep.subr.mxu0 0.0
    %1640 = vmatpush1.msra.mxu0 0.0
    %1641 = vmatprep.subr.mxu0 0.0
    %1642 = vmatpush1.msra.mxu0 0.0
    %1643 = vmatprep.subr.mxu0 0.0
    %1644 = vmatpush1.msra.mxu0 0.0
    %1645 = vmatprep.subr.mxu0 0.0
    %1646 = vmatpush1.msra.mxu0 0.0
    %1647 = vmatprep.subr.mxu0 0.0
    %1648 = vmatpush1.msra.mxu0 0.0
    %1649 = vmatprep.subr.mxu0 0.0
    %1650 = vmatpush1.msra.mxu0 0.0
    %1651 = vmatprep.subr.mxu0 0.0
    %1652 = vmatpush1.msra.mxu0 0.0
    %1653 = vmatprep.subr.mxu0 0.0
    %1654 = vmatpush1.msra.mxu0 0.0
    %1655 = vmatprep.mubr.f32.mxu0 0.0
    %1656 = vmatmul.mubr.f32.gmra.mrb[0].mxu0 %v1590
    %v1657 = vpop.f32.mrb[0].mxu0
    %v1658 = vadd.f32 0.0, %v1657
    %v1659 = vpop.f32.mrb[0].mxu0
    %v1660 = vadd.f32 0.0, %v1659
    %1661 = vdwg.mxu0
    %1662 = vmatprep.subr.mxu0 %v340
    %1663 = vmatpush1.msra.mxu0 %v339
    %1664 = vmatprep.subr.mxu0 %v344
    %1665 = vmatpush1.msra.mxu0 %v343
    %1666 = vmatprep.subr.mxu0 %v348
    %1667 = vmatpush1.msra.mxu0 %v347
    %1668 = vmatprep.subr.mxu0 %v352
    %1669 = vmatpush1.msra.mxu0 %v351
    %1670 = vmatprep.subr.mxu0 %v356
    %1671 = vmatpush1.msra.mxu0 %v355
    %1672 = vmatprep.subr.mxu0 %v360
    %1673 = vmatpush1.msra.mxu0 %v359
    %1674 = vmatprep.subr.mxu0 %v364
    %1675 = vmatpush1.msra.mxu0 %v363
    %1676 = vmatprep.subr.mxu0 %v368
    %1677 = vmatpush1.msra.mxu0 %v367
    %1678 = vmatprep.subr.mxu0 %v372
    %1679 = vmatpush1.msra.mxu0 %v371
    %1680 = vmatprep.subr.mxu0 %v376
    %1681 = vmatpush1.msra.mxu0 %v375
    %1682 = vmatprep.subr.mxu0 %v380
    %1683 = vmatpush1.msra.mxu0 %v379
    %1684 = vmatprep.subr.mxu0 %v384
    %1685 = vmatpush1.msra.mxu0 %v383
    %1686 = vmatprep.subr.mxu0 %v388
    %1687 = vmatpush1.msra.mxu0 %v387
    %1688 = vmatprep.subr.mxu0 %v392
    %1689 = vmatpush1.msra.mxu0 %v391
    %1690 = vmatprep.subr.mxu0 %v396
    %1691 = vmatpush1.msra.mxu0 %v395
    %1692 = vmatprep.subr.mxu0 %v400
    %1693 = vmatpush1.msra.mxu0 %v399
    %1694 = vmatprep.subr.mxu0 0.0
    %1695 = vmatpush1.msra.mxu0 0.0
    %1696 = vmatprep.subr.mxu0 0.0
    %1697 = vmatpush1.msra.mxu0 0.0
    %1698 = vmatprep.subr.mxu0 0.0
    %1699 = vmatpush1.msra.mxu0 0.0
    %1700 = vmatprep.subr.mxu0 0.0
    %1701 = vmatpush1.msra.mxu0 0.0
    %1702 = vmatprep.subr.mxu0 0.0
    %1703 = vmatpush1.msra.mxu0 0.0
    %1704 = vmatprep.subr.mxu0 0.0
    %1705 = vmatpush1.msra.mxu0 0.0
    %1706 = vmatprep.subr.mxu0 0.0
    %1707 = vmatpush1.msra.mxu0 0.0
    %1708 = vmatprep.subr.mxu0 0.0
    %1709 = vmatpush1.msra.mxu0 0.0
    %1710 = vmatprep.subr.mxu0 0.0
    %1711 = vmatpush1.msra.mxu0 0.0
    %1712 = vmatprep.subr.mxu0 0.0
    %1713 = vmatpush1.msra.mxu0 0.0
    %1714 = vmatprep.subr.mxu0 0.0
    %1715 = vmatpush1.msra.mxu0 0.0
    %1716 = vmatprep.subr.mxu0 0.0
    %1717 = vmatpush1.msra.mxu0 0.0
    %1718 = vmatprep.subr.mxu0 0.0
    %1719 = vmatpush1.msra.mxu0 0.0
    %1720 = vmatprep.subr.mxu0 0.0
    %1721 = vmatpush1.msra.mxu0 0.0
    %1722 = vmatprep.subr.mxu0 0.0
    %1723 = vmatpush1.msra.mxu0 0.0
    %1724 = vmatprep.subr.mxu0 0.0
    %1725 = vmatpush1.msra.mxu0 0.0
    %1726 = vmatprep.mubr.f32.mxu0 0.0
    %1727 = vmatmul.mubr.f32.gmra.mrb[0].mxu0 %v1590
    %v1728 = vpop.f32.mrb[0].mxu0
    %v1729 = vadd.f32 0.0, %v1728
    %v1730 = vpop.f32.mrb[0].mxu0
    %v1731 = vadd.f32 0.0, %v1730
    %1732 = vdwg.mxu0
    %v1733 = vadd.f32 %v220, %v1658
    %v1734 = vadd.f32 %v222, %v1660
    %v1735 = vadd.f32 %v333, %v1729
    %v1736 = vadd.f32 %v335, %v1731
    %v1737 = vxor.u32 %v1733, 2147483648
    %v1738 = vxor.u32 %v1734, 2147483648
    %v1739 = vxor.u32 %v1735, 2147483648
    %v1740 = vmul.f32 %v1737, 1.442695
    %v1741 = vpow.pop %v1740
    %v1742 = vmul.f32 %v1738, 1.442695
    %v1743 = vpow.pop %v1742
    %v1744 = vmul.f32 %v1739, 1.442695
    %v1745 = vpow.pop %v1744
    %v1746 = vadd.f32 %v1741, 1.0
    %v1747 = vadd.f32 %v1743, 1.0
    %v1748 = vadd.f32 %v1745, 1.0
    %v1749 = vrcp.pop %v1746
    %v1750 = vmul.f32 1.0, %v1749
    %v1751 = vrcp.pop %v1747
    %v1752 = vmul.f32 1.0, %v1751
    %v1753 = vrcp.pop %v1748
    %v1754 = vmul.f32 1.0, %v1753
    %v1755 = vtanh.pop %v1736
    %v1756 = vmul.f32 %v1752, %v1588
    %v1757 = vmul.f32 %v1750, %v1755
    %v1758 = vadd.f32 %v1756, %v1757
    %v1759 = vtanh.pop %v1758
    %v1760 = vmul.f32 %v1754, %v1759
    %v1761 = vld [vmem:[%s4] sm:$0x1]
    %v1763 = vlaneseq
    %v1764 = vshrl.u32 %v1763, 7
    %v1765 = vsub.s32 0, %v1764
    %v1766 = vrot.slane %v1761, %v1765
    %v1768 = vmul.f32 %v1760, %v1766
    %1769 = vadd.xlane.f32.xlu0 %v1768
    %v1770 = vpop.xlane.xlu0 %1769
    %v1771 = vld [vmem:[#allocation2] sm:$0x1]
    %v1773 = vlaneseq
    %v1774 = vshrl.u32 %v1773, 7
    %v1775 = vsub.s32 0, %v1774
    %v1776 = vrot.slane %v1771, %v1775
    %v1778 = vadd.f32 %v1770, %v1776
    %vm1779 = vcmask 7168
    %1780 = vst.msk [vmem:[%s6] sm:$0xff] %vm1779, %v1778
    // Predicated region
    $region30: #{rnn_model_forward.1} parent=1 // pred_check
      _
    $region31: #{rnn_model_forward.1} parent=1 // pred_check_branch
      %1782 = sbr.rel (0) target = $region33
    $region32: #{rnn_model_forward.1} parent=1 // pred_region
      _
    $region33: #{rnn_model_forward.1} parent=1 // pred_fallthru
      _
    // Predicated region
    $region34: #{rnn_model_forward.1} parent=1 // pred_check
      _
    $region35: #{rnn_model_forward.1} parent=1 // pred_check_branch
      %1784 = sbr.rel (0) target = $region37
    $region36: #{rnn_model_forward.1} parent=1 // pred_region
      _
    $region37: #{rnn_model_forward.1} parent=1 // pred_fallthru
      _
    %1785 = vsyncpa [#allocation4], 1

</llo_original>
